<compile_context>
chip_gen: v7x
topology: tpu7x:2x2x1
jax: 0.10.0
libtpu: 0.0.40
codegen_flags: <defaults>
</compile_context>

<pallas_src>
import functools
import numpy as np
import jax
import jax.numpy as jnp
from jax import lax
from jax.experimental import pallas as pl
from jax.experimental.pallas import tpu as pltpu


# ----------------------------------------------------------------------------
# Tile sizing (budgeted against scoped-VMEM defaults, not physical capacity)
# ----------------------------------------------------------------------------

_VMEM_TILE_BUDGET = 10 * 1024 * 1024   # < v5e's 16 MiB scoped default, with headroom
_VMEM_LIMIT_BYTES = 32 * 1024 * 1024   # explicit limit; valid on v5e/v6e/v7x


def _vmem_estimate(th, H, W, cin, sq, eo):
    f = 4
    x_res = 2 * H * W * cin * f                       # resident image block (dbl buf)
    out_blk = 2 * th * W * eo * f                     # output block (dbl buf)
    weights = 2 * (W * cin * W * sq + 2 * W * sq * W * eo
                   + 12 * W * sq + 2 * W * eo) * f    # block-diag weights (dbl buf)
    work = ((th + 2) * W * cin + 6 * (th + 2) * W * sq
            + 3 * th * W * sq + 2 * th * W * eo) * f  # in-register temporaries
    return x_res + out_blk + weights + work


def _pick_row_tile(N, H, W, cin, sq, eo):
    """Row-tile height TH: divides H, TH%8==0 (or TH==H), fits the budget."""
    cands = [d for d in range(H, 0, -1)
             if H % d == 0 and (d % 8 == 0 or d == H)]
    fitting = [d for d in cands
               if _vmem_estimate(d, H, W, cin, sq, eo) <= _VMEM_TILE_BUDGET]
    if not fitting:
        return cands[-1]
    if N == 1:
        # keep an even number (>=2) of parallel chunks so both v7x cores work
        pref = [d for d in fitting if (H // d) >= 2 and (H // d) % 2 == 0]
        if pref:
            return pref[0]
    return fitting[0]


# ----------------------------------------------------------------------------
# The fused Fire kernel
# ----------------------------------------------------------------------------

def _fire_kernel(x_ref, wsq_ref, bsq_ref, w3_ref, b3_ref, wexp_ref, bexp_ref,
                 o_ref, *, TH, T, W, SQ):
    """Per (image n, row-tile t):
       s   = relu(squeeze(bn1(x)))        -- lane-dense block-diag 1x1 matmul
       t3  = relu(bn3(dw3x3(s)))          -- rolls on the lane axis for column taps
       out = relu([expand1x1(bn2(s)) | bn4(pw(t3))])  -- one block-diag matmul
    """
    t = pl.program_id(1)
    r0 = pl.multiple_of(t * TH, TH)
    H = T * TH

    # ---- gather the TH+2 input rows (clamped; border rows fixed up below) ---
    top = jnp.maximum(r0 - 1, 0)
    bot = jnp.minimum(r0 + TH, H - 1)
    xwin = jnp.concatenate(
        [x_ref[0, pl.ds(top, 1), :],
         x_ref[0, pl.ds(r0, TH), :],
         x_ref[0, pl.ds(bot, 1), :]], axis=0)                  # [TH+2, W*Cin]

    # ---- squeeze (bn1 folded): one lane-dense W-block-diagonal matmul -------
    s = jnp.dot(xwin, wsq_ref[...], preferred_element_type=jnp.float32)
    s = jnp.maximum(s + bsq_ref[...], 0.0)                      # [TH+2, W*SQ]

    # zero the halo rows that fall outside the image (conv zero padding)
    row = lax.broadcasted_iota(jnp.int32, s.shape, 0)
    pad = ((row == 0) & (t == 0)) | ((row == TH + 1) & (t == T - 1))
    s = jnp.where(pad, 0.0, s)

    # ---- depthwise 3x3 (bn3 folded into the taps) ---------------------------
    # Column taps via lane rolls (masked once per shift); row taps are
    # sublane-window slices reused across the three column offsets.
    L = W * SQ
    lane = lax.broadcasted_iota(jnp.int32, s.shape, 1)
    left = jnp.where(lane < SQ, 0.0, pltpu.roll(s, SQ, axis=1))          # s[., w-1]
    right = jnp.where(lane >= L - SQ, 0.0, pltpu.roll(s, L - SQ, axis=1))  # s[., w+1]
    w3 = w3_ref[...]                                            # [9, W*SQ]

    def col_taps(m, kj):
        a = m[1:TH + 1] * w3[3 + kj]                            # centre row first
        a = a + m[0:TH] * w3[kj]
        a = a + m[2:TH + 2] * w3[6 + kj]
        return a

    acc = col_taps(s, 1) + col_taps(left, 0) + col_taps(right, 2)
    t3 = jnp.maximum(acc + b3_ref[...], 0.0)                    # [TH, W*SQ]

    # ---- both expand branches + channel concat as ONE block-diag matmul -----
    lhs = jnp.concatenate([s[1:TH + 1], t3], axis=1)            # [TH, 2*W*SQ]
    out = jnp.dot(lhs, wexp_ref[...], preferred_element_type=jnp.float32)
    out = jnp.maximum(out + bexp_ref[...], 0.0)                 # [TH, W*EO]
    o_ref[0] = out                                              # lane-dense store


def _fire_pallas(x_rows, wsq_big, bsq_rows, w3_lanes, b3_rows, wexp_big,
                 bexp_rows, *, H, W, TH, SQ, EO):
    N = x_rows.shape[0]
    wc = x_rows.shape[2]
    T = H // TH
    kern = functools.partial(_fire_kernel, TH=TH, T=T, W=W, SQ=SQ)
    return pl.pallas_call(
        kern,
        out_shape=jax.ShapeDtypeStruct((N, H, W * EO), jnp.float32),
        grid=(N, T),
        in_specs=[
            # per-image input rows stay resident in VMEM across the t axis
            pl.BlockSpec((1, H, wc), lambda n, t: (n, 0, 0)),
            pl.BlockSpec(wsq_big.shape, lambda n, t: (0, 0)),
            pl.BlockSpec(bsq_rows.shape, lambda n, t: (0, 0)),
            pl.BlockSpec(w3_lanes.shape, lambda n, t: (0, 0)),
            pl.BlockSpec(b3_rows.shape, lambda n, t: (0, 0)),
            pl.BlockSpec(wexp_big.shape, lambda n, t: (0, 0)),
            pl.BlockSpec(bexp_rows.shape, lambda n, t: (0, 0)),
        ],
        out_specs=pl.BlockSpec((1, TH, W * EO), lambda n, t: (n, t, 0)),
        compiler_params=pltpu.CompilerParams(
            dimension_semantics=("parallel", "parallel"),
            vmem_limit_bytes=_VMEM_LIMIT_BYTES),
    )(x_rows, wsq_big, bsq_rows, w3_lanes, b3_rows, wexp_big, bexp_rows)


# ----------------------------------------------------------------------------
# Parameters (PyTorch weight layouts) + BatchNorm folding
# ----------------------------------------------------------------------------

def _bn_params(c, key):
    k1, k2, k3, k4 = jax.random.split(key, 4)
    return dict(
        gamma=1.0 + 0.1 * jax.random.normal(k1, (c,), jnp.float32),
        beta=0.1 * jax.random.normal(k2, (c,), jnp.float32),
        mean=0.1 * jax.random.normal(k3, (c,), jnp.float32),
        var=jax.random.uniform(k4, (c,), jnp.float32, 0.5, 1.5),
    )


def _fold_bn(bn, eps=1e-5):
    s = bn["gamma"] * lax.rsqrt(bn["var"] + eps)
    t = bn["beta"] - bn["mean"] * s
    return s, t


def init_params(inplanes, squeeze_planes, expand1x1_planes, expand3x3_planes, key):
    ks = jax.random.split(key, 10)
    return {
        "bn1": _bn_params(inplanes, ks[0]),
        "squeeze_w": 0.2 * jax.random.normal(ks[1], (squeeze_planes, inplanes, 1, 1), jnp.float32),
        "squeeze_b": 0.1 * jax.random.normal(ks[2], (squeeze_planes,), jnp.float32),
        "bn2": _bn_params(squeeze_planes, ks[3]),
        "e1_w": 0.2 * jax.random.normal(ks[4], (expand1x1_planes, squeeze_planes, 1, 1), jnp.float32),
        "e1_b": 0.1 * jax.random.normal(ks[5], (expand1x1_planes,), jnp.float32),
        "dw_w": 0.2 * jax.random.normal(ks[6], (squeeze_planes, 1, 3, 3), jnp.float32),
        "bn3": _bn_params(squeeze_planes, ks[7]),
        "pw_w": 0.2 * jax.random.normal(ks[8], (expand3x3_planes, squeeze_planes, 1, 1), jnp.float32),
        "bn4": _bn_params(expand3x3_planes, ks[9]),
    }


# ----------------------------------------------------------------------------
# Forward pass (NCHW in / NCHW out; lane-dense row layout inside)
# ----------------------------------------------------------------------------

def fire_forward(params, x_nchw):
    N, cin, H, W = x_nchw.shape

    # ---- fold every BatchNorm into the adjacent conv (tiny host-side math) --
    s1, t1 = _fold_bn(params["bn1"])
    wsq = params["squeeze_w"][:, :, 0, 0]                    # [SQ, Cin]
    wsq_f = (wsq * s1[None, :]).T                            # [Cin, SQ]
    bsq = params["squeeze_b"] + wsq @ t1                     # [SQ]

    s2, t2 = _fold_bn(params["bn2"])
    w1 = params["e1_w"][:, :, 0, 0]                          # [E1, SQ]
    w1_f = (w1 * s2[None, :]).T                              # [SQ, E1]
    b1 = params["e1_b"] + w1 @ t2                            # [E1]

    s3, t3s = _fold_bn(params["bn3"])
    taps = params["dw_w"][:, 0] * s3[:, None, None]          # [SQ, 3, 3]
    taps9 = jnp.transpose(taps, (1, 2, 0)).reshape(9, -1)    # [9, SQ]   (ki*3+kj)

    s4, t4 = _fold_bn(params["bn4"])
    w2 = params["pw_w"][:, :, 0, 0]                          # [E3, SQ]
    w2_f = w2.T * s4[None, :]                                # [SQ, E3]
    b2 = t4                                                  # [E3]

    SQ = wsq_f.shape[1]
    E1, E3 = w1_f.shape[1], w2_f.shape[1]
    EO = E1 + E3

    # ---- lane-flattened (w-major) block-diagonal weights --------------------
    eye_w = jnp.eye(W, dtype=jnp.float32)
    wsq_big = jnp.kron(eye_w, wsq_f)                         # [W*Cin, W*SQ]
    w1_pad = jnp.concatenate([w1_f, jnp.zeros((SQ, E3), jnp.float32)], axis=1)
    w2_pad = jnp.concatenate([jnp.zeros((SQ, E1), jnp.float32), w2_f], axis=1)
    wexp_big = jnp.concatenate(
        [jnp.kron(eye_w, w1_pad), jnp.kron(eye_w, w2_pad)], axis=0)  # [2*W*SQ, W*EO]

    bsq_rows = jnp.tile(bsq, W).reshape(1, W * SQ)
    b3_rows = jnp.tile(t3s, W).reshape(1, W * SQ)
    bexp_rows = jnp.tile(jnp.concatenate([b1, b2]), W).reshape(1, W * EO)
    w3_lanes = jnp.tile(taps9, (1, W))                       # [9, W*SQ]

    # ---- lane-dense NHWC row layout: (N, H, W*Cin) ---------------------------
    x_rows = jnp.transpose(x_nchw, (0, 2, 3, 1)).reshape(N, H, W * cin)

    TH = _pick_row_tile(N, H, W, cin, SQ, EO)
    out = _fire_pallas(x_rows, wsq_big, bsq_rows, w3_lanes, b3_rows,
                       wexp_big, bexp_rows, H=H, W=W, TH=TH, SQ=SQ, EO=EO)
    return jnp.transpose(out.reshape(N, H, W, EO), (0, 3, 1, 2))   # NHWC -> NCHW


# ----------------------------------------------------------------------------
# Pure-JAX (lax.conv) reference for verification
# ----------------------------------------------------------------------------

def reference_forward(params, x, eps=1e-5):
    def bn(v, p):
        g = p["gamma"][None, :, None, None]
        b = p["beta"][None, :, None, None]
        m = p["mean"][None, :, None, None]
        vv = p["var"][None, :, None, None]
        return (v - m) / jnp.sqrt(vv + eps) * g + b

    dn = ("NCHW", "OIHW", "NCHW")
    conv = functools.partial(lax.conv_general_dilated, window_strides=(1, 1),
                             dimension_numbers=dn, precision=lax.Precision.HIGHEST)

    s = conv(bn(x, params["bn1"]), params["squeeze_w"], padding="VALID")
    s = jax.nn.relu(s + params["squeeze_b"][None, :, None, None])

    b1 = conv(bn(s, params["bn2"]), params["e1_w"], padding="VALID")
    b1 = jax.nn.relu(b1 + params["e1_b"][None, :, None, None])

    sqp = s.shape[1]
    t = conv(s, params["dw_w"], padding=((1, 1), (1, 1)), feature_group_count=sqp)
    t = jax.nn.relu(bn(t, params["bn3"]))
    b2 = jax.nn.relu(bn(conv(t, params["pw_w"], padding="VALID"), params["bn4"]))
    return jnp.concatenate([b1, b2], axis=1)


# ----------------------------------------------------------------------------

if __name__ == "__main__":
    key = jax.random.PRNGKey(0)
    kx, kp = jax.random.split(key)

    inplanes, squeeze_planes, e1_planes, e3_planes = 16, 8, 8, 8
    N, H, W = 2, 16, 16
    x = jax.random.normal(kx, (N, inplanes, H, W), jnp.float32)
    params = init_params(inplanes, squeeze_planes, e1_planes, e3_planes, kp)

    out = jax.jit(fire_forward)(params, x)
    out = jax.block_until_ready(out)

    ref = reference_forward(params, x)
    np.testing.assert_allclose(np.asarray(out), np.asarray(ref), rtol=2e-3, atol=2e-3)
    print("KERNEL_OK")
</pallas_src>

<mosaic_0001>
module attributes {stable_mosaic.version = 11 : i64} {
  func.func @_fire_kernel(%arg0: i32, %arg1: i32, %arg2: memref<1x16x256xf32, #tpu.memory_space<vmem>>, %arg3: memref<256x128xf32, #tpu.memory_space<vmem>>, %arg4: memref<1x128xf32, #tpu.memory_space<vmem>>, %arg5: memref<9x128xf32, #tpu.memory_space<vmem>>, %arg6: memref<1x128xf32, #tpu.memory_space<vmem>>, %arg7: memref<256x256xf32, #tpu.memory_space<vmem>>, %arg8: memref<1x256xf32, #tpu.memory_space<vmem>>, %arg9: memref<1x16x256xf32, #tpu.memory_space<vmem>>) attributes {dimension_semantics = [#tpu.dimension_semantics<parallel>, #tpu.dimension_semantics<parallel>], iteration_bounds = array<i64: 2, 1>, scalar_prefetch = 0 : i64, scratch_operands = 0 : i64, tpu.core_type = #tpu.core_type<tc>, window_params = [{transform_indices = @transform_0, window_bounds = array<i64: 1, 16, 256>}, {pipeline_mode = #tpu.pipeline_mode<synchronous>, transform_indices = @transform_1, window_bounds = array<i64: 256, 128>}, {pipeline_mode = #tpu.pipeline_mode<synchronous>, transform_indices = @transform_2, window_bounds = array<i64: 1, 128>}, {pipeline_mode = #tpu.pipeline_mode<synchronous>, transform_indices = @transform_3, window_bounds = array<i64: 9, 128>}, {pipeline_mode = #tpu.pipeline_mode<synchronous>, transform_indices = @transform_4, window_bounds = array<i64: 1, 128>}, {pipeline_mode = #tpu.pipeline_mode<synchronous>, transform_indices = @transform_5, window_bounds = array<i64: 256, 256>}, {pipeline_mode = #tpu.pipeline_mode<synchronous>, transform_indices = @transform_6, window_bounds = array<i64: 1, 256>}, {transform_indices = @transform_7, window_bounds = array<i64: 1, 16, 256>}]} {
    %c16_i32 = arith.constant 16 : i32
    %0 = arith.muli %arg1, %c16_i32 : i32
    %1 = tpu.assume_multiple %0, 16 : i32
    %c1_i32 = arith.constant 1 : i32
    %2 = arith.subi %1, %c1_i32 : i32
    %c0_i32 = arith.constant 0 : i32
    %3 = arith.maxsi %2, %c0_i32 : i32
    %c16_i32_0 = arith.constant 16 : i32
    %4 = arith.addi %1, %c16_i32_0 : i32
    %c15_i32 = arith.constant 15 : i32
    %5 = arith.minsi %4, %c15_i32 : i32
    %c0 = arith.constant 0 : index
    %6 = arith.index_cast %3 : i32 to index
    %c0_1 = arith.constant 0 : index
    %7 = vector.load %arg2[%c0, %6, %c0_1] : memref<1x16x256xf32, #tpu.memory_space<vmem>>, vector<1x1x256xf32>
    %8 = vector.shape_cast %7 : vector<1x1x256xf32> to vector<1x256xf32>
    %c0_2 = arith.constant 0 : index
    %9 = arith.index_cast %1 : i32 to index
    %c0_3 = arith.constant 0 : index
    %10 = vector.load %arg2[%c0_2, %9, %c0_3] : memref<1x16x256xf32, #tpu.memory_space<vmem>>, vector<1x16x256xf32>
    %11 = vector.shape_cast %10 : vector<1x16x256xf32> to vector<16x256xf32>
    %c0_4 = arith.constant 0 : index
    %12 = arith.index_cast %5 : i32 to index
    %c0_5 = arith.constant 0 : index
    %13 = vector.load %arg2[%c0_4, %12, %c0_5] : memref<1x16x256xf32, #tpu.memory_space<vmem>>, vector<1x1x256xf32>
    %14 = vector.shape_cast %13 : vector<1x1x256xf32> to vector<1x256xf32>
    %15 = tpu.concatenate %8, %11, %14 in 0 : vector<1x256xf32>, vector<16x256xf32>, vector<1x256xf32> -> vector<18x256xf32>
    %c0_6 = arith.constant 0 : index
    %c0_7 = arith.constant 0 : index
    %16 = vector.load %arg3[%c0_6, %c0_7] : memref<256x128xf32, #tpu.memory_space<vmem>>, vector<256x128xf32>
    %cst = arith.constant dense<0.000000e+00> : vector<18x128xf32>
    %17 = tpu.matmul %15, %16, %cst {dimension_numbers = #tpu.dot_dimension_numbers<[1], [0], [0], [1], [0, 0, 1, 1], [], []>} : vector<18x256xf32>, vector<256x128xf32>, vector<18x128xf32> -> vector<18x128xf32>
    %c0_8 = arith.constant 0 : index
    %c0_9 = arith.constant 0 : index
    %18 = vector.load %arg4[%c0_8, %c0_9] : memref<1x128xf32, #tpu.memory_space<vmem>>, vector<1x128xf32>
    %19 = vector.broadcast %18 : vector<1x128xf32> to vector<18x128xf32>
    %20 = arith.addf %17, %19 : vector<18x128xf32>
    %cst_10 = arith.constant 0.000000e+00 : f32
    %21 = vector.broadcast %cst_10 : f32 to vector<18x128xf32>
    %22 = arith.maximumf %20, %21 : vector<18x128xf32>
    %23 = tpu.iota {dimensions = array<i32: 0>} : vector<18x128xi32>
    %c0_i32_11 = arith.constant 0 : i32
    %24 = vector.broadcast %c0_i32_11 : i32 to vector<18x128xi32>
    %25 = arith.cmpi eq, %23, %24 : vector<18x128xi32>
    %c0_i32_12 = arith.constant 0 : i32
    %26 = arith.cmpi eq, %arg1, %c0_i32_12 : i32
    %27 = vector.broadcast %26 : i1 to vector<18x128xi1>
    %28 = arith.andi %25, %27 : vector<18x128xi1>
    %c17_i32 = arith.constant 17 : i32
    %29 = vector.broadcast %c17_i32 : i32 to vector<18x128xi32>
    %30 = arith.cmpi eq, %23, %29 : vector<18x128xi32>
    %c0_i32_13 = arith.constant 0 : i32
    %31 = arith.cmpi eq, %arg1, %c0_i32_13 : i32
    %32 = vector.broadcast %31 : i1 to vector<18x128xi1>
    %33 = arith.andi %30, %32 : vector<18x128xi1>
    %34 = arith.ori %28, %33 : vector<18x128xi1>
    %cst_14 = arith.constant 0.000000e+00 : f32
    %35 = vector.broadcast %cst_14 : f32 to vector<18x128xf32>
    %36 = arith.select %34, %35, %22 : vector<18x128xi1>, vector<18x128xf32>
    %37 = tpu.iota {dimensions = array<i32: 1>} : vector<18x128xi32>
    %c8_i32 = arith.constant 8 : i32
    %38 = vector.broadcast %c8_i32 : i32 to vector<18x128xi32>
    %39 = arith.cmpi slt, %37, %38 : vector<18x128xi32>
    %c8_i32_15 = arith.constant 8 : i32
    %40 = tpu.dynamic_rotate %36 by %c8_i32_15 dim 1 : vector<18x128xf32>, i32 -> vector<18x128xf32>
    %cst_16 = arith.constant 0.000000e+00 : f32
    %41 = vector.broadcast %cst_16 : f32 to vector<18x128xf32>
    %42 = arith.select %39, %41, %40 : vector<18x128xi1>, vector<18x128xf32>
    %c120_i32 = arith.constant 120 : i32
    %43 = vector.broadcast %c120_i32 : i32 to vector<18x128xi32>
    %44 = arith.cmpi sge, %37, %43 : vector<18x128xi32>
    %c120_i32_17 = arith.constant 120 : i32
    %45 = tpu.dynamic_rotate %36 by %c120_i32_17 dim 1 : vector<18x128xf32>, i32 -> vector<18x128xf32>
    %cst_18 = arith.constant 0.000000e+00 : f32
    %46 = vector.broadcast %cst_18 : f32 to vector<18x128xf32>
    %47 = arith.select %44, %46, %45 : vector<18x128xi1>, vector<18x128xf32>
    %c0_19 = arith.constant 0 : index
    %c0_20 = arith.constant 0 : index
    %48 = vector.load %arg5[%c0_19, %c0_20] : memref<9x128xf32, #tpu.memory_space<vmem>>, vector<9x128xf32>
    %49 = vector.extract_strided_slice %36 {offsets = [1, 0], sizes = [16, 128], strides = [1, 1]} : vector<18x128xf32> to vector<16x128xf32>
    %50 = vector.extract_strided_slice %48 {offsets = [4, 0], sizes = [1, 128], strides = [1, 1]} : vector<9x128xf32> to vector<1x128xf32>
    %51 = vector.shape_cast %50 : vector<1x128xf32> to vector<128xf32>
    %52 = vector.shape_cast %51 : vector<128xf32> to vector<1x128xf32>
    %53 = vector.broadcast %52 : vector<1x128xf32> to vector<16x128xf32>
    %54 = arith.mulf %49, %53 : vector<16x128xf32>
    %55 = vector.extract_strided_slice %36 {offsets = [0, 0], sizes = [16, 128], strides = [1, 1]} : vector<18x128xf32> to vector<16x128xf32>
    %56 = vector.extract_strided_slice %48 {offsets = [1, 0], sizes = [1, 128], strides = [1, 1]} : vector<9x128xf32> to vector<1x128xf32>
    %57 = vector.shape_cast %56 : vector<1x128xf32> to vector<128xf32>
    %58 = vector.shape_cast %57 : vector<128xf32> to vector<1x128xf32>
    %59 = vector.broadcast %58 : vector<1x128xf32> to vector<16x128xf32>
    %60 = arith.mulf %55, %59 : vector<16x128xf32>
    %61 = arith.addf %54, %60 : vector<16x128xf32>
    %62 = vector.extract_strided_slice %36 {offsets = [2, 0], sizes = [16, 128], strides = [1, 1]} : vector<18x128xf32> to vector<16x128xf32>
    %63 = vector.extract_strided_slice %48 {offsets = [7, 0], sizes = [1, 128], strides = [1, 1]} : vector<9x128xf32> to vector<1x128xf32>
    %64 = vector.shape_cast %63 : vector<1x128xf32> to vector<128xf32>
    %65 = vector.shape_cast %64 : vector<128xf32> to vector<1x128xf32>
    %66 = vector.broadcast %65 : vector<1x128xf32> to vector<16x128xf32>
    %67 = arith.mulf %62, %66 : vector<16x128xf32>
    %68 = arith.addf %61, %67 : vector<16x128xf32>
    %69 = vector.extract_strided_slice %42 {offsets = [1, 0], sizes = [16, 128], strides = [1, 1]} : vector<18x128xf32> to vector<16x128xf32>
    %70 = vector.extract_strided_slice %48 {offsets = [3, 0], sizes = [1, 128], strides = [1, 1]} : vector<9x128xf32> to vector<1x128xf32>
    %71 = vector.shape_cast %70 : vector<1x128xf32> to vector<128xf32>
    %72 = vector.shape_cast %71 : vector<128xf32> to vector<1x128xf32>
    %73 = vector.broadcast %72 : vector<1x128xf32> to vector<16x128xf32>
    %74 = arith.mulf %69, %73 : vector<16x128xf32>
    %75 = vector.extract_strided_slice %42 {offsets = [0, 0], sizes = [16, 128], strides = [1, 1]} : vector<18x128xf32> to vector<16x128xf32>
    %76 = vector.extract_strided_slice %48 {offsets = [0, 0], sizes = [1, 128], strides = [1, 1]} : vector<9x128xf32> to vector<1x128xf32>
    %77 = vector.shape_cast %76 : vector<1x128xf32> to vector<128xf32>
    %78 = vector.shape_cast %77 : vector<128xf32> to vector<1x128xf32>
    %79 = vector.broadcast %78 : vector<1x128xf32> to vector<16x128xf32>
    %80 = arith.mulf %75, %79 : vector<16x128xf32>
    %81 = arith.addf %74, %80 : vector<16x128xf32>
    %82 = vector.extract_strided_slice %42 {offsets = [2, 0], sizes = [16, 128], strides = [1, 1]} : vector<18x128xf32> to vector<16x128xf32>
    %83 = vector.extract_strided_slice %48 {offsets = [6, 0], sizes = [1, 128], strides = [1, 1]} : vector<9x128xf32> to vector<1x128xf32>
    %84 = vector.shape_cast %83 : vector<1x128xf32> to vector<128xf32>
    %85 = vector.shape_cast %84 : vector<128xf32> to vector<1x128xf32>
    %86 = vector.broadcast %85 : vector<1x128xf32> to vector<16x128xf32>
    %87 = arith.mulf %82, %86 : vector<16x128xf32>
    %88 = arith.addf %81, %87 : vector<16x128xf32>
    %89 = arith.addf %68, %88 : vector<16x128xf32>
    %90 = vector.extract_strided_slice %47 {offsets = [1, 0], sizes = [16, 128], strides = [1, 1]} : vector<18x128xf32> to vector<16x128xf32>
    %91 = vector.extract_strided_slice %48 {offsets = [5, 0], sizes = [1, 128], strides = [1, 1]} : vector<9x128xf32> to vector<1x128xf32>
    %92 = vector.shape_cast %91 : vector<1x128xf32> to vector<128xf32>
    %93 = vector.shape_cast %92 : vector<128xf32> to vector<1x128xf32>
    %94 = vector.broadcast %93 : vector<1x128xf32> to vector<16x128xf32>
    %95 = arith.mulf %90, %94 : vector<16x128xf32>
    %96 = vector.extract_strided_slice %47 {offsets = [0, 0], sizes = [16, 128], strides = [1, 1]} : vector<18x128xf32> to vector<16x128xf32>
    %97 = vector.extract_strided_slice %48 {offsets = [2, 0], sizes = [1, 128], strides = [1, 1]} : vector<9x128xf32> to vector<1x128xf32>
    %98 = vector.shape_cast %97 : vector<1x128xf32> to vector<128xf32>
    %99 = vector.shape_cast %98 : vector<128xf32> to vector<1x128xf32>
    %100 = vector.broadcast %99 : vector<1x128xf32> to vector<16x128xf32>
    %101 = arith.mulf %96, %100 : vector<16x128xf32>
    %102 = arith.addf %95, %101 : vector<16x128xf32>
    %103 = vector.extract_strided_slice %47 {offsets = [2, 0], sizes = [16, 128], strides = [1, 1]} : vector<18x128xf32> to vector<16x128xf32>
    %104 = vector.extract_strided_slice %48 {offsets = [8, 0], sizes = [1, 128], strides = [1, 1]} : vector<9x128xf32> to vector<1x128xf32>
    %105 = vector.shape_cast %104 : vector<1x128xf32> to vector<128xf32>
    %106 = vector.shape_cast %105 : vector<128xf32> to vector<1x128xf32>
    %107 = vector.broadcast %106 : vector<1x128xf32> to vector<16x128xf32>
    %108 = arith.mulf %103, %107 : vector<16x128xf32>
    %109 = arith.addf %102, %108 : vector<16x128xf32>
    %110 = arith.addf %89, %109 : vector<16x128xf32>
    %c0_21 = arith.constant 0 : index
    %c0_22 = arith.constant 0 : index
    %111 = vector.load %arg6[%c0_21, %c0_22] : memref<1x128xf32, #tpu.memory_space<vmem>>, vector<1x128xf32>
    %112 = vector.broadcast %111 : vector<1x128xf32> to vector<16x128xf32>
    %113 = arith.addf %110, %112 : vector<16x128xf32>
    %cst_23 = arith.constant 0.000000e+00 : f32
    %114 = vector.broadcast %cst_23 : f32 to vector<16x128xf32>
    %115 = arith.maximumf %113, %114 : vector<16x128xf32>
    %116 = vector.extract_strided_slice %36 {offsets = [1, 0], sizes = [16, 128], strides = [1, 1]} : vector<18x128xf32> to vector<16x128xf32>
    %117 = tpu.concatenate %116, %115 in 1 : vector<16x128xf32>, vector<16x128xf32> -> vector<16x256xf32>
    %c0_24 = arith.constant 0 : index
    %c0_25 = arith.constant 0 : index
    %118 = vector.load %arg7[%c0_24, %c0_25] : memref<256x256xf32, #tpu.memory_space<vmem>>, vector<256x256xf32>
    %cst_26 = arith.constant dense<0.000000e+00> : vector<16x256xf32>
    %119 = tpu.matmul %117, %118, %cst_26 {dimension_numbers = #tpu.dot_dimension_numbers<[1], [0], [0], [1], [0, 0, 1, 1], [], []>} : vector<16x256xf32>, vector<256x256xf32>, vector<16x256xf32> -> vector<16x256xf32>
    %c0_27 = arith.constant 0 : index
    %c0_28 = arith.constant 0 : index
    %120 = vector.load %arg8[%c0_27, %c0_28] : memref<1x256xf32, #tpu.memory_space<vmem>>, vector<1x256xf32>
    %121 = vector.broadcast %120 : vector<1x256xf32> to vector<16x256xf32>
    %122 = arith.addf %119, %121 : vector<16x256xf32>
    %cst_29 = arith.constant 0.000000e+00 : f32
    %123 = vector.broadcast %cst_29 : f32 to vector<16x256xf32>
    %124 = arith.maximumf %122, %123 : vector<16x256xf32>
    %c0_30 = arith.constant 0 : index
    %c0_31 = arith.constant 0 : index
    %c0_32 = arith.constant 0 : index
    %125 = vector.load %arg9[%c0_30, %c0_31, %c0_32] : memref<1x16x256xf32, #tpu.memory_space<vmem>>, vector<1x16x256xf32>
    %126 = vector.shape_cast %125 : vector<1x16x256xf32> to vector<16x256xf32>
    %127 = vector.shape_cast %124 : vector<16x256xf32> to vector<1x16x256xf32>
    tpu.vector_store %arg9[%c0_30, %c0_31, %c0_32], %127 {strides = array<i32>} : memref<1x16x256xf32, #tpu.memory_space<vmem>>, vector<1x16x256xf32>,
    return
  }
  func.func @transform_0(%arg0: i32, %arg1: i32) -> (i32, i32, i32) {
    %c0_i32 = arith.constant 0 : i32
    %c0_i32_0 = arith.constant 0 : i32
    %c0_i32_1 = arith.constant 0 : i32
    return %arg0, %c0_i32, %c0_i32_0 : i32, i32, i32
  }
  func.func @transform_1(%arg0: i32, %arg1: i32) -> (i32, i32) {
    %c0_i32 = arith.constant 0 : i32
    %c0_i32_0 = arith.constant 0 : i32
    %c0_i32_1 = arith.constant 0 : i32
    return %c0_i32, %c0_i32_0 : i32, i32
  }
  func.func @transform_2(%arg0: i32, %arg1: i32) -> (i32, i32) {
    %c0_i32 = arith.constant 0 : i32
    %c0_i32_0 = arith.constant 0 : i32
    %c0_i32_1 = arith.constant 0 : i32
    return %c0_i32, %c0_i32_0 : i32, i32
  }
  func.func @transform_3(%arg0: i32, %arg1: i32) -> (i32, i32) {
    %c0_i32 = arith.constant 0 : i32
    %c0_i32_0 = arith.constant 0 : i32
    %c0_i32_1 = arith.constant 0 : i32
    return %c0_i32, %c0_i32_0 : i32, i32
  }
  func.func @transform_4(%arg0: i32, %arg1: i32) -> (i32, i32) {
    %c0_i32 = arith.constant 0 : i32
    %c0_i32_0 = arith.constant 0 : i32
    %c0_i32_1 = arith.constant 0 : i32
    return %c0_i32, %c0_i32_0 : i32, i32
  }
  func.func @transform_5(%arg0: i32, %arg1: i32) -> (i32, i32) {
    %c0_i32 = arith.constant 0 : i32
    %c0_i32_0 = arith.constant 0 : i32
    %c0_i32_1 = arith.constant 0 : i32
    return %c0_i32, %c0_i32_0 : i32, i32
  }
  func.func @transform_6(%arg0: i32, %arg1: i32) -> (i32, i32) {
    %c0_i32 = arith.constant 0 : i32
    %c0_i32_0 = arith.constant 0 : i32
    %c0_i32_1 = arith.constant 0 : i32
    return %c0_i32, %c0_i32_0 : i32, i32
  }
  func.func @transform_7(%arg0: i32, %arg1: i32) -> (i32, i32, i32) {
    %c0_i32 = arith.constant 0 : i32
    %c0_i32_0 = arith.constant 0 : i32
    return %arg0, %arg1, %c0_i32 : i32, i32, i32
  }
}

</mosaic_0001>

<llo_original>
// kernel: tile.32
$region0: #{tile.32}
  #allocation0 [shape = 's32[1]{0}', space=sflag, size = 0x4, scoped, tag = 'scoped memory for tile.32']
  %s0 = inlined_call_operand.vmem [shape: f32[16], index: 0, kind: input, shape index: {}]
  %s1 = inlined_call_operand.vmem [shape: f32[16,16], index: 1, kind: output, shape index: {}]
  // Predicated region
  $region2: #{tile.32} parent=0 // pred_check
    _
  $region3: #{tile.32} parent=0 // pred_check_branch
    %3 = sbr.rel (0) target = $region5
  $region4: #{tile.32} parent=0 // pred_region
    _
  $region5: #{tile.32} parent=0 // pred_fallthru
    _
  %v4 = vld [vmem:[%s0] ss:$0 sm:$0xff]
  %5 = vst [vmem:[%s1] sm:$0xff] %v4
  %s6 = scalar_lea.vmem %s1, 8
  %7 = vst [vmem:[%s6] sm:$0xff] %v4

// kernel: tile.33
$region0: #{tile.33}
  %s0 = inlined_call_operand.vmem [shape: f32[16,16], index: 0, kind: input, shape index: {}]
  %s1 = inlined_call_operand.vmem [shape: f32[1,256], index: 1, kind: output, shape index: {}]
  $region1: #{tile.33} parent=0
    #allocation0 [shape = 'u8[8192]{0}', space=vmem, size = 0x2000, scoped, tag = 'scoped mem for output reshape']
    %s2 = smov 3
    %v3 = vld [vmem:[%s0] ss:$8 sm:%s2]
    %vm4 = vcmask 130048
    %5 = vst.msk [vmem:[#allocation0] ss:$8 sm:$0x3] %vm4, %v3
    %s6 = scalar_lea.vmem %s0, 7
    %s7 = smov 3
    %v8 = vld [vmem:[%s6] ss:$8 sm:%s7]
    %9 = vrot.lane.b32.xlu0 %v8, 112
    %v10 = vpop.permute.xlu0 %9
    %vm11 = vcmask 1048448
    %12 = vst.msk [vmem:[#allocation0] ss:$8 sm:$0x3] %vm11, %v10
    %s13 = scalar_lea.vmem %s0, 6
    %s14 = smov 3
    %v15 = vld [vmem:[%s13] ss:$8 sm:%s14]
    %16 = vrot.lane.b32.xlu0 %v15, 96
    %v17 = vpop.permute.xlu0 %16
    %vm18 = vcmask 917248
    %19 = vst.msk [vmem:[#allocation0] ss:$8 sm:$0x3] %vm18, %v17
    %s20 = scalar_lea.vmem %s0, 5
    %s21 = smov 3
    %v22 = vld [vmem:[%s20] ss:$8 sm:%s21]
    %23 = vrot.lane.b32.xlu0 %v22, 80
    %v24 = vpop.permute.xlu0 %23
    %vm25 = vcmask 786048
    %26 = vst.msk [vmem:[#allocation0] ss:$8 sm:$0x3] %vm25, %v24
    %s27 = scalar_lea.vmem %s0, 4
    %s28 = smov 3
    %v29 = vld [vmem:[%s27] ss:$8 sm:%s28]
    %30 = vrot.lane.b32.xlu0 %v29, 64
    %v31 = vpop.permute.xlu0 %30
    %vm32 = vcmask 654848
    %33 = vst.msk [vmem:[#allocation0] ss:$8 sm:$0x3] %vm32, %v31
    %s34 = scalar_lea.vmem %s0, 3
    %s35 = smov 3
    %v36 = vld [vmem:[%s34] ss:$8 sm:%s35]
    %37 = vrot.lane.b32.xlu0 %v36, 48
    %v38 = vpop.permute.xlu0 %37
    %vm39 = vcmask 523648
    %40 = vst.msk [vmem:[#allocation0] ss:$8 sm:$0x3] %vm39, %v38
    %s41 = scalar_lea.vmem %s0, 2
    %s42 = smov 3
    %v43 = vld [vmem:[%s41] ss:$8 sm:%s42]
    %44 = vrot.lane.b32.xlu0 %v43, 32
    %v45 = vpop.permute.xlu0 %44
    %vm46 = vcmask 392448
    %47 = vst.msk [vmem:[#allocation0] ss:$8 sm:$0x3] %vm46, %v45
    %s48 = scalar_lea.vmem %s0, 1
    %s49 = smov 3
    %v50 = vld [vmem:[%s48] ss:$8 sm:%s49]
    %51 = vrot.lane.b32.xlu0 %v50, 16
    %v52 = vpop.permute.xlu0 %51
    %vm53 = vcmask 261248
    %54 = vst.msk [vmem:[#allocation0] ss:$8 sm:$0x3] %vm53, %v52
    %s56 = sshllo.u32 0, 1
    %v58 = vld [vmem:[#allocation0] sm:%s56]
    %s59 = sshllo.u32 0, 1
    %60 = vst [vmem:[%s1] sm:%s59] %v58
    %s61 = scalar_lea.vmem [#allocation0], 8
    %v62 = vld [vmem:[%s61] sm:%s56]
    %s63 = sshllo.u32 0, 1
    %s64 = scalar_lea.vmem %s1, 1
    %65 = vst [vmem:[%s64] sm:%s63] %v62

// kernel: tile.22
$region0: #{tile.22}
  #allocation0 [shape = 's32[1]{0}', space=sflag, size = 0x4, scoped, tag = 'scoped memory for tile.22']
  %s0 = inlined_call_operand.vmem [shape: f32[8], index: 0, kind: input, shape index: {}]
  %s1 = inlined_call_operand.vmem [shape: f32[16,8], index: 1, kind: output, shape index: {}]
  // Predicated region
  $region2: #{tile.22} parent=0 // pred_check
    _
  $region3: #{tile.22} parent=0 // pred_check_branch
    %3 = sbr.rel (0) target = $region5
  $region4: #{tile.22} parent=0 // pred_region
    _
  $region5: #{tile.22} parent=0 // pred_fallthru
    _
  %v4 = vld [vmem:[%s0] ss:$0 sm:$0xff]
  %5 = vst [vmem:[%s1] sm:$0xff] %v4
  %s6 = scalar_lea.vmem %s1, 8
  %7 = vst [vmem:[%s6] sm:$0xff] %v4

// kernel: tile.23
$region0: #{tile.23}
  %s0 = inlined_call_operand.vmem [shape: f32[16,8], index: 0, kind: input, shape index: {}]
  %s1 = inlined_call_operand.vmem [shape: f32[1,128], index: 1, kind: output, shape index: {}]
  $region1: #{tile.23} parent=0
    #allocation0 [shape = 'u8[4096]{0}', space=vmem, size = 0x1000, scoped, tag = 'scoped mem for output reshape']
    %v2 = vld [vmem:[%s0] sm:$0x1]
    %vm3 = vcmask 64512
    %4 = vst.msk [vmem:[#allocation0] sm:$0x1] %vm3, %v2
    %s5 = scalar_lea.vmem %s0, 15
    %v6 = vld [vmem:[%s5] sm:$0x1]
    %7 = vrot.lane.b32.xlu0 %v6, 120
    %v8 = vpop.permute.xlu0 %7
    %vm9 = vcmask 1048512
    %10 = vst.msk [vmem:[#allocation0] sm:$0x1] %vm9, %v8
    %s11 = scalar_lea.vmem %s0, 14
    %v12 = vld [vmem:[%s11] sm:$0x1]
    %13 = vrot.lane.b32.xlu0 %v12, 112
    %v14 = vpop.permute.xlu0 %13
    %vm15 = vcmask 982912
    %16 = vst.msk [vmem:[#allocation0] sm:$0x1] %vm15, %v14
    %s17 = scalar_lea.vmem %s0, 13
    %v18 = vld [vmem:[%s17] sm:$0x1]
    %19 = vrot.lane.b32.xlu0 %v18, 104
    %v20 = vpop.permute.xlu0 %19
    %vm21 = vcmask 917312
    %22 = vst.msk [vmem:[#allocation0] sm:$0x1] %vm21, %v20
    %s23 = scalar_lea.vmem %s0, 12
    %v24 = vld [vmem:[%s23] sm:$0x1]
    %25 = vrot.lane.b32.xlu0 %v24, 96
    %v26 = vpop.permute.xlu0 %25
    %vm27 = vcmask 851712
    %28 = vst.msk [vmem:[#allocation0] sm:$0x1] %vm27, %v26
    %s29 = scalar_lea.vmem %s0, 11
    %v30 = vld [vmem:[%s29] sm:$0x1]
    %31 = vrot.lane.b32.xlu0 %v30, 88
    %v32 = vpop.permute.xlu0 %31
    %vm33 = vcmask 786112
    %34 = vst.msk [vmem:[#allocation0] sm:$0x1] %vm33, %v32
    %s35 = scalar_lea.vmem %s0, 10
    %v36 = vld [vmem:[%s35] sm:$0x1]
    %37 = vrot.lane.b32.xlu0 %v36, 80
    %v38 = vpop.permute.xlu0 %37
    %vm39 = vcmask 720512
    %40 = vst.msk [vmem:[#allocation0] sm:$0x1] %vm39, %v38
    %s41 = scalar_lea.vmem %s0, 9
    %v42 = vld [vmem:[%s41] sm:$0x1]
    %43 = vrot.lane.b32.xlu0 %v42, 72
    %v44 = vpop.permute.xlu0 %43
    %vm45 = vcmask 654912
    %46 = vst.msk [vmem:[#allocation0] sm:$0x1] %vm45, %v44
    %s47 = scalar_lea.vmem %s0, 8
    %v48 = vld [vmem:[%s47] sm:$0x1]
    %49 = vrot.lane.b32.xlu0 %v48, 64
    %v50 = vpop.permute.xlu0 %49
    %vm51 = vcmask 589312
    %52 = vst.msk [vmem:[#allocation0] sm:$0x1] %vm51, %v50
    %s53 = scalar_lea.vmem %s0, 7
    %v54 = vld [vmem:[%s53] sm:$0x1]
    %55 = vrot.lane.b32.xlu0 %v54, 56
    %v56 = vpop.permute.xlu0 %55
    %vm57 = vcmask 523712
    %58 = vst.msk [vmem:[#allocation0] sm:$0x1] %vm57, %v56
    %s59 = scalar_lea.vmem %s0, 6
    %v60 = vld [vmem:[%s59] sm:$0x1]
    %61 = vrot.lane.b32.xlu0 %v60, 48
    %v62 = vpop.permute.xlu0 %61
    %vm63 = vcmask 458112
    %64 = vst.msk [vmem:[#allocation0] sm:$0x1] %vm63, %v62
    %s65 = scalar_lea.vmem %s0, 5
    %v66 = vld [vmem:[%s65] sm:$0x1]
    %67 = vrot.lane.b32.xlu0 %v66, 40
    %v68 = vpop.permute.xlu0 %67
    %vm69 = vcmask 392512
    %70 = vst.msk [vmem:[#allocation0] sm:$0x1] %vm69, %v68
    %s71 = scalar_lea.vmem %s0, 4
    %v72 = vld [vmem:[%s71] sm:$0x1]
    %73 = vrot.lane.b32.xlu0 %v72, 32
    %v74 = vpop.permute.xlu0 %73
    %vm75 = vcmask 326912
    %76 = vst.msk [vmem:[#allocation0] sm:$0x1] %vm75, %v74
    %s77 = scalar_lea.vmem %s0, 3
    %v78 = vld [vmem:[%s77] sm:$0x1]
    %79 = vrot.lane.b32.xlu0 %v78, 24
    %v80 = vpop.permute.xlu0 %79
    %vm81 = vcmask 261312
    %82 = vst.msk [vmem:[#allocation0] sm:$0x1] %vm81, %v80
    %s83 = scalar_lea.vmem %s0, 2
    %v84 = vld [vmem:[%s83] sm:$0x1]
    %85 = vrot.lane.b32.xlu0 %v84, 16
    %v86 = vpop.permute.xlu0 %85
    %vm87 = vcmask 195712
    %88 = vst.msk [vmem:[#allocation0] sm:$0x1] %vm87, %v86
    %s89 = scalar_lea.vmem %s0, 1
    %v90 = vld [vmem:[%s89] sm:$0x1]
    %91 = vrot.lane.b32.xlu0 %v90, 8
    %v92 = vpop.permute.xlu0 %91
    %vm93 = vcmask 130112
    %94 = vst.msk [vmem:[#allocation0] sm:$0x1] %vm93, %v92
    %s96 = sshllo.u32 0, 1
    %v98 = vld [vmem:[#allocation0] sm:%s96]
    %s99 = sshllo.u32 0, 1
    %100 = vst [vmem:[%s1] sm:%s99] %v98

// kernel: tile.37
$region0: #{tile.37}
  %s0 = inlined_call_operand.vmem [shape: f32[9,16,8], index: 0, kind: input, shape index: {}]
  %s1 = inlined_call_operand.vmem [shape: f32[9,128], index: 1, kind: output, shape index: {}]
  %s2 = smov 3
  %v3 = vld [vmem:[%s0] ss:$16 sm:%s2]
  %s4 = smov 12
  %v5 = vld [vmem:[%s0] ss:$16 sm:%s4]
  %vm6 = vcmask 1043458
  %v7 = vsel %vm6, %v5, %v3
  %s8 = smov 48
  %v9 = vld [vmem:[%s0] ss:$16 sm:%s8]
  %vm10 = vcmask 1045508
  %v11 = vsel %vm10, %v9, %v7
  %s12 = smov 192
  %v13 = vld [vmem:[%s0] ss:$16 sm:%s12]
  %vm14 = vcmask 1047558
  %v15 = vsel %vm14, %v13, %v11
  %vm16 = vcmask 64512
  %17 = vst.msk [vmem:[%s1] sm:$0xff] %vm16, %v15
  %s18 = scalar_lea.vmem %s0, 128
  %v19 = vld [vmem:[%s18] sm:$0x1]
  %vm20 = vcmask 64512
  %s21 = scalar_lea.vmem %s1, 8
  %22 = vst.msk [vmem:[%s21] sm:$0x1] %vm20, %v19
  %s23 = scalar_lea.vmem %s0, 15
  %s24 = smov 3
  %v25 = vld [vmem:[%s23] ss:$16 sm:%s24]
  %s26 = scalar_lea.vmem %s0, 15
  %s27 = smov 12
  %v28 = vld [vmem:[%s26] ss:$16 sm:%s27]
  %vm29 = vcmask 1043458
  %v30 = vsel %vm29, %v28, %v25
  %s31 = scalar_lea.vmem %s0, 15
  %s32 = smov 48
  %v33 = vld [vmem:[%s31] ss:$16 sm:%s32]
  %vm34 = vcmask 1045508
  %v35 = vsel %vm34, %v33, %v30
  %s36 = scalar_lea.vmem %s0, 15
  %s37 = smov 192
  %v38 = vld [vmem:[%s36] ss:$16 sm:%s37]
  %vm39 = vcmask 1047558
  %v40 = vsel %vm39, %v38, %v35
  %41 = vrot.lane.b32.xlu0 %v40, 120
  %v42 = vpop.permute.xlu0 %41
  %vm43 = vcmask 1048512
  %44 = vst.msk [vmem:[%s1] sm:$0xff] %vm43, %v42
  %s45 = scalar_lea.vmem %s0, 143
  %v46 = vld [vmem:[%s45] sm:$0x1]
  %47 = vrot.lane.b32.xlu0 %v46, 120
  %v48 = vpop.permute.xlu0 %47
  %vm49 = vcmask 1048512
  %s50 = scalar_lea.vmem %s1, 8
  %51 = vst.msk [vmem:[%s50] sm:$0x1] %vm49, %v48
  %s52 = scalar_lea.vmem %s0, 14
  %s53 = smov 3
  %v54 = vld [vmem:[%s52] ss:$16 sm:%s53]
  %s55 = scalar_lea.vmem %s0, 14
  %s56 = smov 12
  %v57 = vld [vmem:[%s55] ss:$16 sm:%s56]
  %vm58 = vcmask 1043458
  %v59 = vsel %vm58, %v57, %v54
  %s60 = scalar_lea.vmem %s0, 14
  %s61 = smov 48
  %v62 = vld [vmem:[%s60] ss:$16 sm:%s61]
  %vm63 = vcmask 1045508
  %v64 = vsel %vm63, %v62, %v59
  %s65 = scalar_lea.vmem %s0, 14
  %s66 = smov 192
  %v67 = vld [vmem:[%s65] ss:$16 sm:%s66]
  %vm68 = vcmask 1047558
  %v69 = vsel %vm68, %v67, %v64
  %70 = vrot.lane.b32.xlu0 %v69, 112
  %v71 = vpop.permute.xlu0 %70
  %vm72 = vcmask 982912
  %73 = vst.msk [vmem:[%s1] sm:$0xff] %vm72, %v71
  %s74 = scalar_lea.vmem %s0, 142
  %v75 = vld [vmem:[%s74] sm:$0x1]
  %76 = vrot.lane.b32.xlu0 %v75, 112
  %v77 = vpop.permute.xlu0 %76
  %vm78 = vcmask 982912
  %s79 = scalar_lea.vmem %s1, 8
  %80 = vst.msk [vmem:[%s79] sm:$0x1] %vm78, %v77
  %s81 = scalar_lea.vmem %s0, 13
  %s82 = smov 3
  %v83 = vld [vmem:[%s81] ss:$16 sm:%s82]
  %s84 = scalar_lea.vmem %s0, 13
  %s85 = smov 12
  %v86 = vld [vmem:[%s84] ss:$16 sm:%s85]
  %vm87 = vcmask 1043458
  %v88 = vsel %vm87, %v86, %v83
  %s89 = scalar_lea.vmem %s0, 13
  %s90 = smov 48
  %v91 = vld [vmem:[%s89] ss:$16 sm:%s90]
  %vm92 = vcmask 1045508
  %v93 = vsel %vm92, %v91, %v88
  %s94 = scalar_lea.vmem %s0, 13
  %s95 = smov 192
  %v96 = vld [vmem:[%s94] ss:$16 sm:%s95]
  %vm97 = vcmask 1047558
  %v98 = vsel %vm97, %v96, %v93
  %99 = vrot.lane.b32.xlu0 %v98, 104
  %v100 = vpop.permute.xlu0 %99
  %vm101 = vcmask 917312
  %102 = vst.msk [vmem:[%s1] sm:$0xff] %vm101, %v100
  %s103 = scalar_lea.vmem %s0, 141
  %v104 = vld [vmem:[%s103] sm:$0x1]
  %105 = vrot.lane.b32.xlu0 %v104, 104
  %v106 = vpop.permute.xlu0 %105
  %vm107 = vcmask 917312
  %s108 = scalar_lea.vmem %s1, 8
  %109 = vst.msk [vmem:[%s108] sm:$0x1] %vm107, %v106
  %s110 = scalar_lea.vmem %s0, 12
  %s111 = smov 3
  %v112 = vld [vmem:[%s110] ss:$16 sm:%s111]
  %s113 = scalar_lea.vmem %s0, 12
  %s114 = smov 12
  %v115 = vld [vmem:[%s113] ss:$16 sm:%s114]
  %vm116 = vcmask 1043458
  %v117 = vsel %vm116, %v115, %v112
  %s118 = scalar_lea.vmem %s0, 12
  %s119 = smov 48
  %v120 = vld [vmem:[%s118] ss:$16 sm:%s119]
  %vm121 = vcmask 1045508
  %v122 = vsel %vm121, %v120, %v117
  %s123 = scalar_lea.vmem %s0, 12
  %s124 = smov 192
  %v125 = vld [vmem:[%s123] ss:$16 sm:%s124]
  %vm126 = vcmask 1047558
  %v127 = vsel %vm126, %v125, %v122
  %128 = vrot.lane.b32.xlu0 %v127, 96
  %v129 = vpop.permute.xlu0 %128
  %vm130 = vcmask 851712
  %131 = vst.msk [vmem:[%s1] sm:$0xff] %vm130, %v129
  %s132 = scalar_lea.vmem %s0, 140
  %v133 = vld [vmem:[%s132] sm:$0x1]
  %134 = vrot.lane.b32.xlu0 %v133, 96
  %v135 = vpop.permute.xlu0 %134
  %vm136 = vcmask 851712
  %s137 = scalar_lea.vmem %s1, 8
  %138 = vst.msk [vmem:[%s137] sm:$0x1] %vm136, %v135
  %s139 = scalar_lea.vmem %s0, 11
  %s140 = smov 3
  %v141 = vld [vmem:[%s139] ss:$16 sm:%s140]
  %s142 = scalar_lea.vmem %s0, 11
  %s143 = smov 12
  %v144 = vld [vmem:[%s142] ss:$16 sm:%s143]
  %vm145 = vcmask 1043458
  %v146 = vsel %vm145, %v144, %v141
  %s147 = scalar_lea.vmem %s0, 11
  %s148 = smov 48
  %v149 = vld [vmem:[%s147] ss:$16 sm:%s148]
  %vm150 = vcmask 1045508
  %v151 = vsel %vm150, %v149, %v146
  %s152 = scalar_lea.vmem %s0, 11
  %s153 = smov 192
  %v154 = vld [vmem:[%s152] ss:$16 sm:%s153]
  %vm155 = vcmask 1047558
  %v156 = vsel %vm155, %v154, %v151
  %157 = vrot.lane.b32.xlu0 %v156, 88
  %v158 = vpop.permute.xlu0 %157
  %vm159 = vcmask 786112
  %160 = vst.msk [vmem:[%s1] sm:$0xff] %vm159, %v158
  %s161 = scalar_lea.vmem %s0, 139
  %v162 = vld [vmem:[%s161] sm:$0x1]
  %163 = vrot.lane.b32.xlu0 %v162, 88
  %v164 = vpop.permute.xlu0 %163
  %vm165 = vcmask 786112
  %s166 = scalar_lea.vmem %s1, 8
  %167 = vst.msk [vmem:[%s166] sm:$0x1] %vm165, %v164
  %s168 = scalar_lea.vmem %s0, 10
  %s169 = smov 3
  %v170 = vld [vmem:[%s168] ss:$16 sm:%s169]
  %s171 = scalar_lea.vmem %s0, 10
  %s172 = smov 12
  %v173 = vld [vmem:[%s171] ss:$16 sm:%s172]
  %vm174 = vcmask 1043458
  %v175 = vsel %vm174, %v173, %v170
  %s176 = scalar_lea.vmem %s0, 10
  %s177 = smov 48
  %v178 = vld [vmem:[%s176] ss:$16 sm:%s177]
  %vm179 = vcmask 1045508
  %v180 = vsel %vm179, %v178, %v175
  %s181 = scalar_lea.vmem %s0, 10
  %s182 = smov 192
  %v183 = vld [vmem:[%s181] ss:$16 sm:%s182]
  %vm184 = vcmask 1047558
  %v185 = vsel %vm184, %v183, %v180
  %186 = vrot.lane.b32.xlu0 %v185, 80
  %v187 = vpop.permute.xlu0 %186
  %vm188 = vcmask 720512
  %189 = vst.msk [vmem:[%s1] sm:$0xff] %vm188, %v187
  %s190 = scalar_lea.vmem %s0, 138
  %v191 = vld [vmem:[%s190] sm:$0x1]
  %192 = vrot.lane.b32.xlu0 %v191, 80
  %v193 = vpop.permute.xlu0 %192
  %vm194 = vcmask 720512
  %s195 = scalar_lea.vmem %s1, 8
  %196 = vst.msk [vmem:[%s195] sm:$0x1] %vm194, %v193
  %s197 = scalar_lea.vmem %s0, 9
  %s198 = smov 3
  %v199 = vld [vmem:[%s197] ss:$16 sm:%s198]
  %s200 = scalar_lea.vmem %s0, 9
  %s201 = smov 12
  %v202 = vld [vmem:[%s200] ss:$16 sm:%s201]
  %vm203 = vcmask 1043458
  %v204 = vsel %vm203, %v202, %v199
  %s205 = scalar_lea.vmem %s0, 9
  %s206 = smov 48
  %v207 = vld [vmem:[%s205] ss:$16 sm:%s206]
  %vm208 = vcmask 1045508
  %v209 = vsel %vm208, %v207, %v204
  %s210 = scalar_lea.vmem %s0, 9
  %s211 = smov 192
  %v212 = vld [vmem:[%s210] ss:$16 sm:%s211]
  %vm213 = vcmask 1047558
  %v214 = vsel %vm213, %v212, %v209
  %215 = vrot.lane.b32.xlu0 %v214, 72
  %v216 = vpop.permute.xlu0 %215
  %vm217 = vcmask 654912
  %218 = vst.msk [vmem:[%s1] sm:$0xff] %vm217, %v216
  %s219 = scalar_lea.vmem %s0, 137
  %v220 = vld [vmem:[%s219] sm:$0x1]
  %221 = vrot.lane.b32.xlu0 %v220, 72
  %v222 = vpop.permute.xlu0 %221
  %vm223 = vcmask 654912
  %s224 = scalar_lea.vmem %s1, 8
  %225 = vst.msk [vmem:[%s224] sm:$0x1] %vm223, %v222
  %s226 = scalar_lea.vmem %s0, 8
  %s227 = smov 3
  %v228 = vld [vmem:[%s226] ss:$16 sm:%s227]
  %s229 = scalar_lea.vmem %s0, 8
  %s230 = smov 12
  %v231 = vld [vmem:[%s229] ss:$16 sm:%s230]
  %vm232 = vcmask 1043458
  %v233 = vsel %vm232, %v231, %v228
  %s234 = scalar_lea.vmem %s0, 8
  %s235 = smov 48
  %v236 = vld [vmem:[%s234] ss:$16 sm:%s235]
  %vm237 = vcmask 1045508
  %v238 = vsel %vm237, %v236, %v233
  %s239 = scalar_lea.vmem %s0, 8
  %s240 = smov 192
  %v241 = vld [vmem:[%s239] ss:$16 sm:%s240]
  %vm242 = vcmask 1047558
  %v243 = vsel %vm242, %v241, %v238
  %244 = vrot.lane.b32.xlu0 %v243, 64
  %v245 = vpop.permute.xlu0 %244
  %vm246 = vcmask 589312
  %247 = vst.msk [vmem:[%s1] sm:$0xff] %vm246, %v245
  %s248 = scalar_lea.vmem %s0, 136
  %v249 = vld [vmem:[%s248] sm:$0x1]
  %250 = vrot.lane.b32.xlu0 %v249, 64
  %v251 = vpop.permute.xlu0 %250
  %vm252 = vcmask 589312
  %s253 = scalar_lea.vmem %s1, 8
  %254 = vst.msk [vmem:[%s253] sm:$0x1] %vm252, %v251
  %s255 = scalar_lea.vmem %s0, 7
  %s256 = smov 3
  %v257 = vld [vmem:[%s255] ss:$16 sm:%s256]
  %s258 = scalar_lea.vmem %s0, 7
  %s259 = smov 12
  %v260 = vld [vmem:[%s258] ss:$16 sm:%s259]
  %vm261 = vcmask 1043458
  %v262 = vsel %vm261, %v260, %v257
  %s263 = scalar_lea.vmem %s0, 7
  %s264 = smov 48
  %v265 = vld [vmem:[%s263] ss:$16 sm:%s264]
  %vm266 = vcmask 1045508
  %v267 = vsel %vm266, %v265, %v262
  %s268 = scalar_lea.vmem %s0, 7
  %s269 = smov 192
  %v270 = vld [vmem:[%s268] ss:$16 sm:%s269]
  %vm271 = vcmask 1047558
  %v272 = vsel %vm271, %v270, %v267
  %273 = vrot.lane.b32.xlu0 %v272, 56
  %v274 = vpop.permute.xlu0 %273
  %vm275 = vcmask 523712
  %276 = vst.msk [vmem:[%s1] sm:$0xff] %vm275, %v274
  %s277 = scalar_lea.vmem %s0, 135
  %v278 = vld [vmem:[%s277] sm:$0x1]
  %279 = vrot.lane.b32.xlu0 %v278, 56
  %v280 = vpop.permute.xlu0 %279
  %vm281 = vcmask 523712
  %s282 = scalar_lea.vmem %s1, 8
  %283 = vst.msk [vmem:[%s282] sm:$0x1] %vm281, %v280
  %s284 = scalar_lea.vmem %s0, 6
  %s285 = smov 3
  %v286 = vld [vmem:[%s284] ss:$16 sm:%s285]
  %s287 = scalar_lea.vmem %s0, 6
  %s288 = smov 12
  %v289 = vld [vmem:[%s287] ss:$16 sm:%s288]
  %vm290 = vcmask 1043458
  %v291 = vsel %vm290, %v289, %v286
  %s292 = scalar_lea.vmem %s0, 6
  %s293 = smov 48
  %v294 = vld [vmem:[%s292] ss:$16 sm:%s293]
  %vm295 = vcmask 1045508
  %v296 = vsel %vm295, %v294, %v291
  %s297 = scalar_lea.vmem %s0, 6
  %s298 = smov 192
  %v299 = vld [vmem:[%s297] ss:$16 sm:%s298]
  %vm300 = vcmask 1047558
  %v301 = vsel %vm300, %v299, %v296
  %302 = vrot.lane.b32.xlu0 %v301, 48
  %v303 = vpop.permute.xlu0 %302
  %vm304 = vcmask 458112
  %305 = vst.msk [vmem:[%s1] sm:$0xff] %vm304, %v303
  %s306 = scalar_lea.vmem %s0, 134
  %v307 = vld [vmem:[%s306] sm:$0x1]
  %308 = vrot.lane.b32.xlu0 %v307, 48
  %v309 = vpop.permute.xlu0 %308
  %vm310 = vcmask 458112
  %s311 = scalar_lea.vmem %s1, 8
  %312 = vst.msk [vmem:[%s311] sm:$0x1] %vm310, %v309
  %s313 = scalar_lea.vmem %s0, 5
  %s314 = smov 3
  %v315 = vld [vmem:[%s313] ss:$16 sm:%s314]
  %s316 = scalar_lea.vmem %s0, 5
  %s317 = smov 12
  %v318 = vld [vmem:[%s316] ss:$16 sm:%s317]
  %vm319 = vcmask 1043458
  %v320 = vsel %vm319, %v318, %v315
  %s321 = scalar_lea.vmem %s0, 5
  %s322 = smov 48
  %v323 = vld [vmem:[%s321] ss:$16 sm:%s322]
  %vm324 = vcmask 1045508
  %v325 = vsel %vm324, %v323, %v320
  %s326 = scalar_lea.vmem %s0, 5
  %s327 = smov 192
  %v328 = vld [vmem:[%s326] ss:$16 sm:%s327]
  %vm329 = vcmask 1047558
  %v330 = vsel %vm329, %v328, %v325
  %331 = vrot.lane.b32.xlu0 %v330, 40
  %v332 = vpop.permute.xlu0 %331
  %vm333 = vcmask 392512
  %334 = vst.msk [vmem:[%s1] sm:$0xff] %vm333, %v332
  %s335 = scalar_lea.vmem %s0, 133
  %v336 = vld [vmem:[%s335] sm:$0x1]
  %337 = vrot.lane.b32.xlu0 %v336, 40
  %v338 = vpop.permute.xlu0 %337
  %vm339 = vcmask 392512
  %s340 = scalar_lea.vmem %s1, 8
  %341 = vst.msk [vmem:[%s340] sm:$0x1] %vm339, %v338
  %s342 = scalar_lea.vmem %s0, 4
  %s343 = smov 3
  %v344 = vld [vmem:[%s342] ss:$16 sm:%s343]
  %s345 = scalar_lea.vmem %s0, 4
  %s346 = smov 12
  %v347 = vld [vmem:[%s345] ss:$16 sm:%s346]
  %vm348 = vcmask 1043458
  %v349 = vsel %vm348, %v347, %v344
  %s350 = scalar_lea.vmem %s0, 4
  %s351 = smov 48
  %v352 = vld [vmem:[%s350] ss:$16 sm:%s351]
  %vm353 = vcmask 1045508
  %v354 = vsel %vm353, %v352, %v349
  %s355 = scalar_lea.vmem %s0, 4
  %s356 = smov 192
  %v357 = vld [vmem:[%s355] ss:$16 sm:%s356]
  %vm358 = vcmask 1047558
  %v359 = vsel %vm358, %v357, %v354
  %360 = vrot.lane.b32.xlu0 %v359, 32
  %v361 = vpop.permute.xlu0 %360
  %vm362 = vcmask 326912
  %363 = vst.msk [vmem:[%s1] sm:$0xff] %vm362, %v361
  %s364 = scalar_lea.vmem %s0, 132
  %v365 = vld [vmem:[%s364] sm:$0x1]
  %366 = vrot.lane.b32.xlu0 %v365, 32
  %v367 = vpop.permute.xlu0 %366
  %vm368 = vcmask 326912
  %s369 = scalar_lea.vmem %s1, 8
  %370 = vst.msk [vmem:[%s369] sm:$0x1] %vm368, %v367
  %s371 = scalar_lea.vmem %s0, 3
  %s372 = smov 3
  %v373 = vld [vmem:[%s371] ss:$16 sm:%s372]
  %s374 = scalar_lea.vmem %s0, 3
  %s375 = smov 12
  %v376 = vld [vmem:[%s374] ss:$16 sm:%s375]
  %vm377 = vcmask 1043458
  %v378 = vsel %vm377, %v376, %v373
  %s379 = scalar_lea.vmem %s0, 3
  %s380 = smov 48
  %v381 = vld [vmem:[%s379] ss:$16 sm:%s380]
  %vm382 = vcmask 1045508
  %v383 = vsel %vm382, %v381, %v378
  %s384 = scalar_lea.vmem %s0, 3
  %s385 = smov 192
  %v386 = vld [vmem:[%s384] ss:$16 sm:%s385]
  %vm387 = vcmask 1047558
  %v388 = vsel %vm387, %v386, %v383
  %389 = vrot.lane.b32.xlu0 %v388, 24
  %v390 = vpop.permute.xlu0 %389
  %vm391 = vcmask 261312
  %392 = vst.msk [vmem:[%s1] sm:$0xff] %vm391, %v390
  %s393 = scalar_lea.vmem %s0, 131
  %v394 = vld [vmem:[%s393] sm:$0x1]
  %395 = vrot.lane.b32.xlu0 %v394, 24
  %v396 = vpop.permute.xlu0 %395
  %vm397 = vcmask 261312
  %s398 = scalar_lea.vmem %s1, 8
  %399 = vst.msk [vmem:[%s398] sm:$0x1] %vm397, %v396
  %s400 = scalar_lea.vmem %s0, 2
  %s401 = smov 3
  %v402 = vld [vmem:[%s400] ss:$16 sm:%s401]
  %s403 = scalar_lea.vmem %s0, 2
  %s404 = smov 12
  %v405 = vld [vmem:[%s403] ss:$16 sm:%s404]
  %vm406 = vcmask 1043458
  %v407 = vsel %vm406, %v405, %v402
  %s408 = scalar_lea.vmem %s0, 2
  %s409 = smov 48
  %v410 = vld [vmem:[%s408] ss:$16 sm:%s409]
  %vm411 = vcmask 1045508
  %v412 = vsel %vm411, %v410, %v407
  %s413 = scalar_lea.vmem %s0, 2
  %s414 = smov 192
  %v415 = vld [vmem:[%s413] ss:$16 sm:%s414]
  %vm416 = vcmask 1047558
  %v417 = vsel %vm416, %v415, %v412
  %418 = vrot.lane.b32.xlu0 %v417, 16
  %v419 = vpop.permute.xlu0 %418
  %vm420 = vcmask 195712
  %421 = vst.msk [vmem:[%s1] sm:$0xff] %vm420, %v419
  %s422 = scalar_lea.vmem %s0, 130
  %v423 = vld [vmem:[%s422] sm:$0x1]
  %424 = vrot.lane.b32.xlu0 %v423, 16
  %v425 = vpop.permute.xlu0 %424
  %vm426 = vcmask 195712
  %s427 = scalar_lea.vmem %s1, 8
  %428 = vst.msk [vmem:[%s427] sm:$0x1] %vm426, %v425
  %s429 = scalar_lea.vmem %s0, 1
  %s430 = smov 3
  %v431 = vld [vmem:[%s429] ss:$16 sm:%s430]
  %s432 = scalar_lea.vmem %s0, 1
  %s433 = smov 12
  %v434 = vld [vmem:[%s432] ss:$16 sm:%s433]
  %vm435 = vcmask 1043458
  %v436 = vsel %vm435, %v434, %v431
  %s437 = scalar_lea.vmem %s0, 1
  %s438 = smov 48
  %v439 = vld [vmem:[%s437] ss:$16 sm:%s438]
  %vm440 = vcmask 1045508
  %v441 = vsel %vm440, %v439, %v436
  %s442 = scalar_lea.vmem %s0, 1
  %s443 = smov 192
  %v444 = vld [vmem:[%s442] ss:$16 sm:%s443]
  %vm445 = vcmask 1047558
  %v446 = vsel %vm445, %v444, %v441
  %447 = vrot.lane.b32.xlu0 %v446, 8
  %v448 = vpop.permute.xlu0 %447
  %vm449 = vcmask 130112
  %450 = vst.msk [vmem:[%s1] sm:$0xff] %vm449, %v448
  %s451 = scalar_lea.vmem %s0, 129
  %v452 = vld [vmem:[%s451] sm:$0x1]
  %453 = vrot.lane.b32.xlu0 %v452, 8
  %v454 = vpop.permute.xlu0 %453
  %vm455 = vcmask 130112
  %s456 = scalar_lea.vmem %s1, 8
  %457 = vst.msk [vmem:[%s456] sm:$0x1] %vm455, %v454

// kernel: fire_forward.1
$region0: #{fire_forward.1}
  #allocation0 [shape = 'u32[]', space=smem, size = 0x4, offset = 0x4, fixed_abs, tag = 'smem constant byte address 0x4 - core index']
  #allocation1 [shape = 'u32[144,128]{1,0:T(1,128)}', space=vmem, size = 0x12000, scoped, tag = 'internal scratch']
  %s0 = inlined_call_operand.vmem [shape: f32[2,16,256], index: 0, kind: input, shape index: {}]
  %s1 = inlined_call_operand.vmem [shape: f32[256,128], index: 1, kind: input, shape index: {}]
  %s2 = inlined_call_operand.vmem [shape: f32[1,128], index: 2, kind: input, shape index: {}]
  %s3 = inlined_call_operand.vmem [shape: f32[9,128], index: 3, kind: input, shape index: {}]
  %s4 = inlined_call_operand.vmem [shape: f32[1,128], index: 4, kind: input, shape index: {}]
  %s5 = inlined_call_operand.vmem [shape: f32[256,256], index: 5, kind: input, shape index: {}]
  %s6 = inlined_call_operand.vmem [shape: f32[1,256], index: 6, kind: input, shape index: {}]
  %s7 = inlined_call_operand.vmem [shape: f32[2,16,256], index: 7, kind: output, shape index: {}]
  %s8 = sld [smem:[#allocation0]]
  $region61: #{fire_forward.1} parent=0
    _
  %s10 = ssub.s32 1, %s8
  %s11 = scalar_select 0, %s10, %s8
  loop: start=0, step=1, limit=4
  $region2: #{fire_forward.1} parent=0 // loop_pre_header
    _
  $region3: #{fire_forward.1} parent=0 // loop_header
    %s13 = sphi 0, %s17
    %p14 = scmp.ge.s32.totalorder %s13, 4
    %s20 = sphi 0, %s32
    %s21 = sphi 0, %s28
    %s22 = sphi 0, %s20
    %s23 = sphi 0, %s21
    %s24 = sphi 0, %s22
    %s25 = sphi 0, %s23
    %s35 = sphi 0, %s37
    %s38 = sphi 0, %s35
    %s39 = sphi 0, %s38
    %s55 = sphi 0, %s39
    %s59 = sphi 0, %s59
    %s61 = sphi 0, %s59
    %s62 = sphi 0, %s61
    %s76 = sphi 0, %s62
    %s80 = sphi 0, %s80
    %s82 = sphi 0, %s80
    %s83 = sphi 0, %s82
    %s97 = sphi 0, %s83
    %s101 = sphi 0, %s101
    %s103 = sphi 0, %s101
    %s104 = sphi 0, %s103
    %s118 = sphi 0, %s104
    %s122 = sphi 0, %s122
    %s124 = sphi 0, %s122
    %s125 = sphi 0, %s124
    %s139 = sphi 0, %s125
    %s143 = sphi 0, %s143
    %s145 = sphi 0, %s143
    %s146 = sphi 0, %s145
    %s160 = sphi 0, %s146
    %s164 = sphi 0, %s164
    %s166 = sphi 0, %s164
    %s167 = sphi 0, %s166
    %s181 = sphi 0, %s167
    %s189 = sphi 0, %s191
    %s192 = sphi 0, %s189
    %s193 = sphi 0, %s192
    %s209 = sphi 0, %s193
  $region4: #{fire_forward.1} parent=0 // loop_header_branch
    %16 = sbr.rel (%p14) target = $region8
  $region5: #{fire_forward.1} parent=0 // loop_body
    %s18 = ssub.s32 %s13, 1
    %s19 = ssub.s32 %s13, 2
    %s26 = sadd.s32 1, %s21
    %p27 = scmp.ge.s32.totalorder %s26, 1
    %s28 = scalar_select %p27, 0, %s26
    %s29 = sadd.s32 1, %s20
    %s30 = scalar_select %p27, %s29, %s20
    %p31 = scmp.ge.s32.totalorder %s30, 2
    %s32 = scalar_select %p31, 0, %s30
    %s33 = ssub.s32 %s20, %s32
    %p34 = scmp.eq.s32.totalorder %s33, 0
    %s36 = sadd.s32 %s35, 1
    %s37 = scalar_select %p34, %s35, %s36
    %p40 = pneg %p34
    %p41 = scmp.eq.s32.totalorder %s13, 1
    %p42 = por %p40, %p41
    %p43 = scmp.ne.s32.totalorder %s35, %s38
    %p44 = scmp.eq.s32.totalorder %s13, 0
    %p45 = por %p43, %p44
    %p46 = scmp.ne.s32.totalorder %s35, %s38
    %p47 = scmp.eq.s32.totalorder %s18, 1
    %p48 = por %p46, %p47
    %p49 = scmp.ne.s32.totalorder %s38, %s39
    %p50 = scmp.eq.s32.totalorder %s18, 0
    %p51 = por %p49, %p50
    %p52 = scmp.ne.s32.totalorder %s38, %s39
    %p53 = scmp.eq.s32.totalorder %s19, 1
    %p54 = por %p52, %p53
    %p56 = scmp.ne.s32.totalorder %s39, %s55
    %p57 = scmp.eq.s32.totalorder %s19, 0
    %p58 = por %p56, %p57
    %s60 = sadd.s32 %s59, 1
    %p63 = scmp.eq.s32.totalorder %s13, 1
    %p64 = scmp.ne.s32.totalorder %s59, %s61
    %p65 = scmp.eq.s32.totalorder %s13, 0
    %p66 = por %p64, %p65
    %p67 = scmp.ne.s32.totalorder %s59, %s61
    %p68 = scmp.eq.s32.totalorder %s18, 1
    %p69 = por %p67, %p68
    %p70 = scmp.ne.s32.totalorder %s61, %s62
    %p71 = scmp.eq.s32.totalorder %s18, 0
    %p72 = por %p70, %p71
    %p73 = scmp.ne.s32.totalorder %s61, %s62
    %p74 = scmp.eq.s32.totalorder %s19, 1
    %p75 = por %p73, %p74
    %p77 = scmp.ne.s32.totalorder %s62, %s76
    %p78 = scmp.eq.s32.totalorder %s19, 0
    %p79 = por %p77, %p78
    %s81 = sadd.s32 %s80, 1
    %p84 = scmp.eq.s32.totalorder %s13, 1
    %p85 = scmp.ne.s32.totalorder %s80, %s82
    %p86 = scmp.eq.s32.totalorder %s13, 0
    %p87 = por %p85, %p86
    %p88 = scmp.ne.s32.totalorder %s80, %s82
    %p89 = scmp.eq.s32.totalorder %s18, 1
    %p90 = por %p88, %p89
    %p91 = scmp.ne.s32.totalorder %s82, %s83
    %p92 = scmp.eq.s32.totalorder %s18, 0
    %p93 = por %p91, %p92
    %p94 = scmp.ne.s32.totalorder %s82, %s83
    %p95 = scmp.eq.s32.totalorder %s19, 1
    %p96 = por %p94, %p95
    %p98 = scmp.ne.s32.totalorder %s83, %s97
    %p99 = scmp.eq.s32.totalorder %s19, 0
    %p100 = por %p98, %p99
    %s102 = sadd.s32 %s101, 1
    %p105 = scmp.eq.s32.totalorder %s13, 1
    %p106 = scmp.ne.s32.totalorder %s101, %s103
    %p107 = scmp.eq.s32.totalorder %s13, 0
    %p108 = por %p106, %p107
    %p109 = scmp.ne.s32.totalorder %s101, %s103
    %p110 = scmp.eq.s32.totalorder %s18, 1
    %p111 = por %p109, %p110
    %p112 = scmp.ne.s32.totalorder %s103, %s104
    %p113 = scmp.eq.s32.totalorder %s18, 0
    %p114 = por %p112, %p113
    %p115 = scmp.ne.s32.totalorder %s103, %s104
    %p116 = scmp.eq.s32.totalorder %s19, 1
    %p117 = por %p115, %p116
    %p119 = scmp.ne.s32.totalorder %s104, %s118
    %p120 = scmp.eq.s32.totalorder %s19, 0
    %p121 = por %p119, %p120
    %s123 = sadd.s32 %s122, 1
    %p126 = scmp.eq.s32.totalorder %s13, 1
    %p127 = scmp.ne.s32.totalorder %s122, %s124
    %p128 = scmp.eq.s32.totalorder %s13, 0
    %p129 = por %p127, %p128
    %p130 = scmp.ne.s32.totalorder %s122, %s124
    %p131 = scmp.eq.s32.totalorder %s18, 1
    %p132 = por %p130, %p131
    %p133 = scmp.ne.s32.totalorder %s124, %s125
    %p134 = scmp.eq.s32.totalorder %s18, 0
    %p135 = por %p133, %p134
    %p136 = scmp.ne.s32.totalorder %s124, %s125
    %p137 = scmp.eq.s32.totalorder %s19, 1
    %p138 = por %p136, %p137
    %p140 = scmp.ne.s32.totalorder %s125, %s139
    %p141 = scmp.eq.s32.totalorder %s19, 0
    %p142 = por %p140, %p141
    %s144 = sadd.s32 %s143, 1
    %p147 = scmp.eq.s32.totalorder %s13, 1
    %p148 = scmp.ne.s32.totalorder %s143, %s145
    %p149 = scmp.eq.s32.totalorder %s13, 0
    %p150 = por %p148, %p149
    %p151 = scmp.ne.s32.totalorder %s143, %s145
    %p152 = scmp.eq.s32.totalorder %s18, 1
    %p153 = por %p151, %p152
    %p154 = scmp.ne.s32.totalorder %s145, %s146
    %p155 = scmp.eq.s32.totalorder %s18, 0
    %p156 = por %p154, %p155
    %p157 = scmp.ne.s32.totalorder %s145, %s146
    %p158 = scmp.eq.s32.totalorder %s19, 1
    %p159 = por %p157, %p158
    %p161 = scmp.ne.s32.totalorder %s146, %s160
    %p162 = scmp.eq.s32.totalorder %s19, 0
    %p163 = por %p161, %p162
    %s165 = sadd.s32 %s164, 1
    %p168 = scmp.eq.s32.totalorder %s13, 1
    %p169 = scmp.ne.s32.totalorder %s164, %s166
    %p170 = scmp.eq.s32.totalorder %s13, 0
    %p171 = por %p169, %p170
    %p172 = scmp.ne.s32.totalorder %s164, %s166
    %p173 = scmp.eq.s32.totalorder %s18, 1
    %p174 = por %p172, %p173
    %p175 = scmp.ne.s32.totalorder %s166, %s167
    %p176 = scmp.eq.s32.totalorder %s18, 0
    %p177 = por %p175, %p176
    %p178 = scmp.ne.s32.totalorder %s166, %s167
    %p179 = scmp.eq.s32.totalorder %s19, 1
    %p180 = por %p178, %p179
    %p182 = scmp.ne.s32.totalorder %s167, %s181
    %p183 = scmp.eq.s32.totalorder %s19, 0
    %p184 = por %p182, %p183
    %s185 = ssub.s32 %s20, %s32
    %s186 = ssub.s32 %s21, %s28
    %s187 = sor.u32 %s185, %s186
    %p188 = scmp.eq.s32.totalorder %s187, 0
    %s190 = sadd.s32 %s189, 1
    %s191 = scalar_select %p188, %s189, %s190
    %p194 = pneg %p188
    %p195 = scmp.eq.s32.totalorder %s13, 1
    %p196 = por %p194, %p195
    %p197 = scmp.ne.s32.totalorder %s189, %s192
    %p198 = scmp.eq.s32.totalorder %s13, 0
    %p199 = por %p197, %p198
    %p200 = scmp.ne.s32.totalorder %s189, %s192
    %p201 = scmp.eq.s32.totalorder %s18, 1
    %p202 = por %p200, %p201
    %p203 = scmp.ne.s32.totalorder %s192, %s193
    %p204 = scmp.eq.s32.totalorder %s18, 0
    %p205 = por %p203, %p204
    %p206 = scmp.ne.s32.totalorder %s192, %s193
    %p207 = scmp.eq.s32.totalorder %s19, 1
    %p208 = por %p206, %p207
    %p210 = scmp.ne.s32.totalorder %s193, %s209
    %p211 = scmp.eq.s32.totalorder %s19, 0
    %p212 = por %p210, %p211
    %p213 = scmp.le.s32.totalorder 1, %s13
    %p214 = scmp.lt.s32.totalorder %s13, 3
    %p215 = pnand %p213, %p214
    %p216 = pneg %p215
    // Predicated region
    $region9: #{fire_forward.1} parent=5 // pred_check
      _
    $region10: #{fire_forward.1} parent=5 // pred_check_branch
      %218 = sbr.rel (%p215) target = $region12
    $region11: #{fire_forward.1} parent=5 // pred_region
      %s219 = ssub.s32 %s13, 1
      // Predicated region
      $region13: #{fire_forward.1} parent=11 // pred_check
        %p220 = pneg %p72
      $region14: #{fire_forward.1} parent=11 // pred_check_branch
        %222 = sbr.rel (%p220) target = $region16
      $region15: #{fire_forward.1} parent=11 // pred_region
        _
      $region16: #{fire_forward.1} parent=11 // pred_fallthru
        _
      // Predicated region
      $region17: #{fire_forward.1} parent=11 // pred_check
        %p223 = pneg %p93
      $region18: #{fire_forward.1} parent=11 // pred_check_branch
        %225 = sbr.rel (%p223) target = $region20
      $region19: #{fire_forward.1} parent=11 // pred_region
        _
      $region20: #{fire_forward.1} parent=11 // pred_fallthru
        _
      // Predicated region
      $region21: #{fire_forward.1} parent=11 // pred_check
        %p226 = pneg %p114
      $region22: #{fire_forward.1} parent=11 // pred_check_branch
        %228 = sbr.rel (%p226) target = $region24
      $region23: #{fire_forward.1} parent=11 // pred_region
        _
      $region24: #{fire_forward.1} parent=11 // pred_fallthru
        _
      // Predicated region
      $region25: #{fire_forward.1} parent=11 // pred_check
        %p229 = pneg %p135
      $region26: #{fire_forward.1} parent=11 // pred_check_branch
        %231 = sbr.rel (%p229) target = $region28
      $region27: #{fire_forward.1} parent=11 // pred_region
        _
      $region28: #{fire_forward.1} parent=11 // pred_fallthru
        _
      // Predicated region
      $region29: #{fire_forward.1} parent=11 // pred_check
        %p232 = pneg %p156
      $region30: #{fire_forward.1} parent=11 // pred_check_branch
        %234 = sbr.rel (%p232) target = $region32
      $region31: #{fire_forward.1} parent=11 // pred_region
        _
      $region32: #{fire_forward.1} parent=11 // pred_fallthru
        _
      // Predicated region
      $region33: #{fire_forward.1} parent=11 // pred_check
        %p235 = pneg %p177
      $region34: #{fire_forward.1} parent=11 // pred_check_branch
        %237 = sbr.rel (%p235) target = $region36
      $region35: #{fire_forward.1} parent=11 // pred_region
        _
      $region36: #{fire_forward.1} parent=11 // pred_fallthru
        _
    $region12: #{fire_forward.1} parent=5 // pred_fallthru
      _
    %p238 = scmp.lt.s32.totalorder %s13, 2
    // Predicated region
    $region37: #{fire_forward.1} parent=5 // pred_check
      %p239 = pneg %p238
    $region38: #{fire_forward.1} parent=5 // pred_check_branch
      %241 = sbr.rel (%p239) target = $region40
    $region39: #{fire_forward.1} parent=5 // pred_region
      // Predicated region
      $region41: #{fire_forward.1} parent=39 // pred_check
        %p242 = pneg %p45
      $region42: #{fire_forward.1} parent=39 // pred_check_branch
        %244 = sbr.rel (%p242) target = $region44
      $region43: #{fire_forward.1} parent=39 // pred_region
        %p245 = scmp.lt.s32.totalorder %s20, 1
        %s246 = scalar_select %p245, %s20, 1
        %s247 = smul.addr %s246, 4
        %s248 = smul.addr %s247, 8
        %s249 = scalar_lea.vmem %s0, %s248
      $region44: #{fire_forward.1} parent=39 // pred_fallthru
        _
    $region40: #{fire_forward.1} parent=5 // pred_fallthru
      _
    %p250 = scmp.le.s32.totalorder 1, %s13
    %p251 = scmp.lt.s32.totalorder %s13, 3
    %p252 = pnand %p250, %p251
    %p253 = pneg %p252
    // Predicated region
    $region45: #{fire_forward.1} parent=5 // pred_check
      _
    $region46: #{fire_forward.1} parent=5 // pred_check_branch
      %255 = sbr.rel (%p252) target = $region48
    $region47: #{fire_forward.1} parent=5 // pred_region
      %s256 = ssub.s32 %s13, 1
      %p257 = scmp.lt.s32.totalorder %s22, 1
      %s258 = scalar_select %p257, %s22, 1
      %s259 = smul.addr %s258, 4
      %s260 = smul.addr %s259, 8
      %s261 = scalar_lea.vmem %s0, %s260
      %p262 = pneg %p51
      %p263 = pneg %p48
      %p264 = pneg %p72
      %p265 = pneg %p69
      %p266 = pneg %p93
      %p267 = pneg %p90
      %p268 = pneg %p114
      %p269 = pneg %p111
      %p270 = pneg %p135
      %p271 = pneg %p132
      %p272 = pneg %p156
      %p273 = pneg %p153
      %p274 = pneg %p177
      %p275 = pneg %p174
      %p276 = pneg %p205
      %p277 = pneg %p202
      %s278 = smul.u32 2, %s23
      %p279 = scmp.lt.s32.totalorder %s22, 1
      %s280 = scalar_select %p279, %s22, 1
      %p281 = scmp.lt.s32.totalorder %s278, 1
      %s282 = scalar_select %p281, %s278, 1
      %s283 = smul.addr %s282, 2
      %s284 = smul.addr %s280, 4
      %s285 = sadd.s32 %s283, %s284
      %s286 = smul.addr %s285, 8
      %s287 = scalar_lea.vmem %s7, %s286
      %p288 = scmp.lt.s32.totalorder %s22, 1
      %s289 = scalar_select %p288, %s22, 1
      %s290 = smul.addr %s289, 4
      %s291 = smul.addr %s290, 8
      %s292 = scalar_lea.vmem %s0, %s291
      %s293 = smul.u32 2, %s23
      %p294 = scmp.lt.s32.totalorder %s22, 1
      %s295 = scalar_select %p294, %s22, 1
      %p296 = scmp.lt.s32.totalorder %s293, 1
      %s297 = scalar_select %p296, %s293, 1
      %s298 = smul.addr %s297, 2
      %s299 = smul.addr %s295, 4
      %s300 = sadd.s32 %s298, %s299
      %s301 = smul.addr %s300, 8
      %s302 = scalar_lea.vmem %s7, %s301
      %s303 = smul.u32 2, %s23
      %s304 = smul.u32 %s23, 16
      %s305 = ssub.s32 %s304, 1
      %p306 = scmp.gt.s32.totalorder %s305, 0
      %s307 = scalar_select %p306, %s305, 0
      %s308 = sadd.s32 %s304, 16
      %p309 = scmp.lt.s32.totalorder %s308, 15
      %s310 = scalar_select %p309, %s308, 15
      %s311 = sshra.s32 %s307, 3
      %s312 = sand.u32 %s307, 7
      %s313 = sshra.s32 %s307, 3
      %s314 = sand.u32 %s307, 7
      %s315 = smul.u32 %s311, 2
      %s316 = smul.u32 %s315, 8
      %s317 = sadd.s32 %s316, %s314
      %s318 = scalar_lea.vmem %s292, %s317
      %v319 = vld [vmem:[%s318] ss:$8 sm:$0x3]
      %s320 = sshra.s32 %s304, 3
      %s321 = sand.u32 %s304, 7
      %s322 = smul.u32 %s320, 2
      %s323 = smul.addr %s322, 8
      %s324 = scalar_lea.vmem %s292, %s323
      %v325 = vld [vmem:[%s324] sm:$0xff]
      %v326 = vld [vmem:[%s324 + $0x8] sm:$0xff]
      %v327 = vld [vmem:[%s324 + $0x10] sm:$0xff]
      %v328 = vld [vmem:[%s324 + $0x18] sm:$0xff]
      %s329 = sshra.s32 %s310, 3
      %s330 = sand.u32 %s310, 7
      %s331 = sshra.s32 %s310, 3
      %s332 = sand.u32 %s310, 7
      %s333 = smul.u32 %s329, 2
      %s334 = smul.u32 %s333, 8
      %s335 = sadd.s32 %s334, %s332
      %s336 = scalar_lea.vmem %s292, %s335
      %v337 = vld [vmem:[%s336] ss:$8 sm:$0x3]
      %v339 = vlaneseq
      %v340 = vshrl.u32 %v339, 7
      %v341 = vsub.s32 0, %v340
      %v342 = vrot.slane %v319, %v341
      %v343 = vlaneseq
      %v344 = vshrl.u32 %v343, 7
      %v345 = vsub.s32 1, %v344
      %v346 = vrot.slane %v319, %v345
      %vm353 = vcmask 1040384
      %v354 = vrot.slane %v325, 7
      %v355 = vrot.slane %v326, 7
      %v356 = vrot.slane %v327, 7
      %v357 = vsel %vm353, %v354, %v356
      %v358 = vrot.slane %v328, 7
      %v359 = vsel %vm353, %v355, %v358
      %v367 = vlaneseq
      %v368 = vshrl.u32 %v367, 7
      %v369 = vsub.s32 0, %v368
      %v370 = vrot.slane %v337, %v369
      %v371 = vlaneseq
      %v372 = vshrl.u32 %v371, 7
      %v373 = vsub.s32 1, %v372
      %v374 = vrot.slane %v337, %v373
      %v377 = vsel %vm353, %v342, %v354
      %v378 = vsel %vm353, %v346, %v355
      %v379 = vsel %vm353, %v356, %v370
      %v380 = vsel %vm353, %v358, %v374
      %v381 = vld [vmem:[%s1] sm:$0xff]
      %v382 = vld [vmem:[%s1 + $0x8] sm:$0xff]
      %v383 = vld [vmem:[%s1 + $0x10] sm:$0xff]
      %v384 = vld [vmem:[%s1 + $0x18] sm:$0xff]
      %v385 = vld [vmem:[%s1 + $0x20] sm:$0xff]
      %v386 = vld [vmem:[%s1 + $0x28] sm:$0xff]
      %v387 = vld [vmem:[%s1 + $0x30] sm:$0xff]
      %v388 = vld [vmem:[%s1 + $0x38] sm:$0xff]
      %v389 = vld [vmem:[%s1 + $0x40] sm:$0xff]
      %v390 = vld [vmem:[%s1 + $0x48] sm:$0xff]
      %v391 = vld [vmem:[%s1 + $0x50] sm:$0xff]
      %v392 = vld [vmem:[%s1 + $0x58] sm:$0xff]
      %v393 = vld [vmem:[%s1 + $0x60] sm:$0xff]
      %v394 = vld [vmem:[%s1 + $0x68] sm:$0xff]
      %v395 = vld [vmem:[%s1 + $0x70] sm:$0xff]
      %v396 = vld [vmem:[%s1 + $0x78] sm:$0xff]
      %v397 = vld [vmem:[%s1 + $0x80] sm:$0xff]
      %v398 = vld [vmem:[%s1 + $0x88] sm:$0xff]
      %v399 = vld [vmem:[%s1 + $0x90] sm:$0xff]
      %v400 = vld [vmem:[%s1 + $0x98] sm:$0xff]
      %v401 = vld [vmem:[%s1 + $0xa0] sm:$0xff]
      %v402 = vld [vmem:[%s1 + $0xa8] sm:$0xff]
      %v403 = vld [vmem:[%s1 + $0xb0] sm:$0xff]
      %v404 = vld [vmem:[%s1 + $0xb8] sm:$0xff]
      %v405 = vld [vmem:[%s1 + $0xc0] sm:$0xff]
      %v406 = vld [vmem:[%s1 + $0xc8] sm:$0xff]
      %v407 = vld [vmem:[%s1 + $0xd0] sm:$0xff]
      %v408 = vld [vmem:[%s1 + $0xd8] sm:$0xff]
      %v409 = vld [vmem:[%s1 + $0xe0] sm:$0xff]
      %v410 = vld [vmem:[%s1 + $0xe8] sm:$0xff]
      %v411 = vld [vmem:[%s1 + $0xf0] sm:$0xff]
      %v412 = vld [vmem:[%s1 + $0xf8] sm:$0xff]
      %v413 = vld [vmem:[%s2] sm:$0x1]
      %v415 = vlaneseq
      %v416 = vshrl.u32 %v415, 7
      %v417 = vsub.s32 0, %v416
      %v418 = vrot.slane %v413, %v417
      %420 = vmatprep.subr.mxu0 0.0
      %421 = vmatpush1.msra.mxu0 %v381
      %422 = vmatprep.subr.mxu0 0.0
      %423 = vmatpush1.msra.mxu0 %v382
      %424 = vmatprep.subr.mxu0 0.0
      %425 = vmatpush1.msra.mxu0 %v383
      %426 = vmatprep.subr.mxu0 0.0
      %427 = vmatpush1.msra.mxu0 %v384
      %428 = vmatprep.subr.mxu0 0.0
      %429 = vmatpush1.msra.mxu0 %v385
      %430 = vmatprep.subr.mxu0 0.0
      %431 = vmatpush1.msra.mxu0 %v386
      %432 = vmatprep.subr.mxu0 0.0
      %433 = vmatpush1.msra.mxu0 %v387
      %434 = vmatprep.subr.mxu0 0.0
      %435 = vmatpush1.msra.mxu0 %v388
      %436 = vmatprep.subr.mxu0 0.0
      %437 = vmatpush1.msra.mxu0 %v389
      %438 = vmatprep.subr.mxu0 0.0
      %439 = vmatpush1.msra.mxu0 %v390
      %440 = vmatprep.subr.mxu0 0.0
      %441 = vmatpush1.msra.mxu0 %v391
      %442 = vmatprep.subr.mxu0 0.0
      %443 = vmatpush1.msra.mxu0 %v392
      %444 = vmatprep.subr.mxu0 0.0
      %445 = vmatpush1.msra.mxu0 %v393
      %446 = vmatprep.subr.mxu0 0.0
      %447 = vmatpush1.msra.mxu0 %v394
      %448 = vmatprep.subr.mxu0 0.0
      %449 = vmatpush1.msra.mxu0 %v395
      %450 = vmatprep.subr.mxu0 0.0
      %451 = vmatpush1.msra.mxu0 %v396
      %452 = vmatprep.subr.mxu0 0.0
      %453 = vmatpush1.msra.mxu0 %v397
      %454 = vmatprep.subr.mxu0 0.0
      %455 = vmatpush1.msra.mxu0 %v398
      %456 = vmatprep.subr.mxu0 0.0
      %457 = vmatpush1.msra.mxu0 %v399
      %458 = vmatprep.subr.mxu0 0.0
      %459 = vmatpush1.msra.mxu0 %v400
      %460 = vmatprep.subr.mxu0 0.0
      %461 = vmatpush1.msra.mxu0 %v401
      %462 = vmatprep.subr.mxu0 0.0
      %463 = vmatpush1.msra.mxu0 %v402
      %464 = vmatprep.subr.mxu0 0.0
      %465 = vmatpush1.msra.mxu0 %v403
      %466 = vmatprep.subr.mxu0 0.0
      %467 = vmatpush1.msra.mxu0 %v404
      %468 = vmatprep.subr.mxu0 0.0
      %469 = vmatpush1.msra.mxu0 %v405
      %470 = vmatprep.subr.mxu0 0.0
      %471 = vmatpush1.msra.mxu0 %v406
      %472 = vmatprep.subr.mxu0 0.0
      %473 = vmatpush1.msra.mxu0 %v407
      %474 = vmatprep.subr.mxu0 0.0
      %475 = vmatpush1.msra.mxu0 %v408
      %476 = vmatprep.subr.mxu0 0.0
      %477 = vmatpush1.msra.mxu0 %v409
      %478 = vmatprep.subr.mxu0 0.0
      %479 = vmatpush1.msra.mxu0 %v410
      %480 = vmatprep.subr.mxu0 0.0
      %481 = vmatpush1.msra.mxu0 %v411
      %482 = vmatprep.subr.mxu0 0.0
      %483 = vmatpush1.msra.mxu0 %v412
      %484 = vmatprep.mubr.f32.mxu0 %v378
      %485 = vmatmul.mubr.f32.gmra.mrb[0].mxu0 %v377
      %v486 = vpop.f32.mrb[0].mxu0
      %v487 = vadd.f32 %v418, %v486
      %v488 = vpop.f32.mrb[0].mxu0
      %489 = vmatprep.mubr.f32.mxu0 %v359
      %490 = vmatmul.mubr.f32.gmra.mrb[0].mxu0 %v357
      %v491 = vpop.f32.mrb[0].mxu0
      %v492 = vadd.f32 %v418, %v491
      %v493 = vpop.f32.mrb[0].mxu0
      %494 = vmatprep.mubr.f32.mxu0 %v380
      %495 = vmatmul.mubr.f32.gmra.mrb[0].mxu0 %v379
      %v496 = vpop.f32.mrb[0].mxu0
      %v497 = vadd.f32 %v418, %v496
      %v498 = vpop.f32.mrb[0].mxu0
      %499 = vdwg.mxu0
      %v500 = vmax.f32 %v487, 0.0
      %v501 = vmax.f32 %v492, 0.0
      %v502 = vmax.f32 %v497, 0.0
      %v503 = vlaneseq
      %v504 = vshrl.u32 %v503, 7
      %v505 = vadd.s32 %v504, 8
      %v506 = vadd.s32 %v504, 16
      %vm507 = vcmp.eq.s32.totalorder %v504, 0
      %vm508 = vcmp.eq.s32.totalorder %v505, 0
      %vm509 = vcmp.eq.s32.totalorder %v506, 0
      %p510 = scmp.eq.s32.totalorder %s23, 0
      %s511 = scalar_select %p510, 1, 0
      %v512 = vstv %s511
      %vm513 = vcmp.eq.s32.totalorder %v512, 1
      %vm514 = vmand %vm507, %vm513
      %vm515 = vmand %vm508, %vm513
      %vm516 = vmand %vm509, %vm513
      %vm517 = vcmp.eq.s32.totalorder %v504, 17
      %vm518 = vcmp.eq.s32.totalorder %v505, 17
      %vm519 = vcmp.eq.s32.totalorder %v506, 17
      %vm520 = vmand %vm517, %vm513
      %vm521 = vmand %vm518, %vm513
      %vm522 = vmand %vm519, %vm513
      %vm523 = vmor %vm514, %vm520
      %vm524 = vmor %vm515, %vm521
      %vm525 = vmor %vm516, %vm522
      %v526 = vsel %vm523, 0.0, %v500
      %v527 = vsel %vm524, 0.0, %v501
      %v528 = vsel %vm525, 0.0, %v502
      %v529 = vlaneseq
      %v530 = vand.u32 %v529, 127
      %vm531 = vcmp.lt.s32.totalorder %v530, 8
      %532 = vrot.lane.b32.xlu0 %v526, 8
      %v533 = vpop.permute.xlu0 %532
      %534 = vrot.lane.b32.xlu0 %v527, 8
      %v535 = vpop.permute.xlu0 %534
      %536 = vrot.lane.b32.xlu0 %v528, 8
      %v537 = vpop.permute.xlu0 %536
      %v538 = vsel %vm531, 0.0, %v533
      %v539 = vsel %vm531, 0.0, %v535
      %v540 = vsel %vm531, 0.0, %v537
      %vm541 = vcmp.ge.s32.totalorder %v530, 120
      %542 = vrot.lane.b32.xlu0 %v526, 120
      %v543 = vpop.permute.xlu0 %542
      %544 = vrot.lane.b32.xlu0 %v527, 120
      %v545 = vpop.permute.xlu0 %544
      %546 = vrot.lane.b32.xlu0 %v528, 120
      %v547 = vpop.permute.xlu0 %546
      %v548 = vsel %vm541, 0.0, %v543
      %v549 = vsel %vm541, 0.0, %v545
      %v550 = vsel %vm541, 0.0, %v547
      %v551 = vld [vmem:[%s3] sm:$0xff]
      %v552 = vld [vmem:[%s3 + $0x8] sm:$0x1]
      %v553 = vlaneseq
      %v554 = vshrl.u32 %v553, 7
      %v555 = vsub.s32 4, %v554
      %v556 = vrot.slane %v551, %v555
      %v557 = vmul.f32 %v526, %v556
      %v558 = vmul.f32 %v527, %v556
      %v559 = vmul.f32 %v528, %v556
      %v560 = vlaneseq
      %v561 = vshrl.u32 %v560, 7
      %v562 = vsub.s32 1, %v561
      %v563 = vrot.slane %v551, %v562
      %v564 = vmul.f32 %v526, %v563
      %v565 = vmul.f32 %v527, %v563
      %v568 = vrot.slane %v564, 7
      %v569 = vrot.slane %v565, 7
      %v570 = vsel %vm353, %v568, %v569
      %v574 = vadd.f32 %v557, %v568
      %v575 = vadd.f32 %v558, %v570
      %v576 = vadd.f32 %v559, %v569
      %v577 = vlaneseq
      %v578 = vshrl.u32 %v577, 7
      %v579 = vsub.s32 7, %v578
      %v580 = vrot.slane %v551, %v579
      %v581 = vmul.f32 %v526, %v580
      %v582 = vmul.f32 %v527, %v580
      %v583 = vmul.f32 %v528, %v580
      %vm587 = vcmask 1046528
      %v588 = vrot.slane %v581, 1
      %v589 = vrot.slane %v582, 1
      %v590 = vsel %vm587, %v588, %v589
      %v591 = vrot.slane %v583, 1
      %v592 = vsel %vm587, %v589, %v591
      %v596 = vadd.f32 %v574, %v590
      %v597 = vadd.f32 %v575, %v592
      %v598 = vadd.f32 %v576, %v591
      %v599 = vlaneseq
      %v600 = vshrl.u32 %v599, 7
      %v601 = vsub.s32 3, %v600
      %v602 = vrot.slane %v551, %v601
      %v603 = vmul.f32 %v538, %v602
      %v604 = vmul.f32 %v539, %v602
      %v605 = vmul.f32 %v540, %v602
      %v606 = vlaneseq
      %v607 = vshrl.u32 %v606, 7
      %v608 = vsub.s32 0, %v607
      %v609 = vrot.slane %v551, %v608
      %v610 = vmul.f32 %v538, %v609
      %v611 = vmul.f32 %v539, %v609
      %v614 = vrot.slane %v610, 7
      %v615 = vrot.slane %v611, 7
      %v616 = vsel %vm353, %v614, %v615
      %v620 = vadd.f32 %v603, %v614
      %v621 = vadd.f32 %v604, %v616
      %v622 = vadd.f32 %v605, %v615
      %v623 = vlaneseq
      %v624 = vshrl.u32 %v623, 7
      %v625 = vsub.s32 6, %v624
      %v626 = vrot.slane %v551, %v625
      %v627 = vmul.f32 %v538, %v626
      %v628 = vmul.f32 %v539, %v626
      %v629 = vmul.f32 %v540, %v626
      %v633 = vrot.slane %v627, 1
      %v634 = vrot.slane %v628, 1
      %v635 = vsel %vm587, %v633, %v634
      %v636 = vrot.slane %v629, 1
      %v637 = vsel %vm587, %v634, %v636
      %v641 = vadd.f32 %v620, %v635
      %v642 = vadd.f32 %v621, %v637
      %v643 = vadd.f32 %v622, %v636
      %v644 = vadd.f32 %v596, %v641
      %v645 = vadd.f32 %v597, %v642
      %v646 = vadd.f32 %v598, %v643
      %v647 = vlaneseq
      %v648 = vshrl.u32 %v647, 7
      %v649 = vsub.s32 5, %v648
      %v650 = vrot.slane %v551, %v649
      %v651 = vmul.f32 %v548, %v650
      %v652 = vmul.f32 %v549, %v650
      %v653 = vmul.f32 %v550, %v650
      %v654 = vlaneseq
      %v655 = vshrl.u32 %v654, 7
      %v656 = vsub.s32 2, %v655
      %v657 = vrot.slane %v551, %v656
      %v658 = vmul.f32 %v548, %v657
      %v659 = vmul.f32 %v549, %v657
      %v662 = vrot.slane %v658, 7
      %v663 = vrot.slane %v659, 7
      %v664 = vsel %vm353, %v662, %v663
      %v668 = vadd.f32 %v651, %v662
      %v669 = vadd.f32 %v652, %v664
      %v670 = vadd.f32 %v653, %v663
      %v671 = vlaneseq
      %v672 = vshrl.u32 %v671, 7
      %v673 = vsub.s32 0, %v672
      %v674 = vrot.slane %v552, %v673
      %v675 = vmul.f32 %v548, %v674
      %v676 = vmul.f32 %v549, %v674
      %v677 = vmul.f32 %v550, %v674
      %v681 = vrot.slane %v675, 1
      %v682 = vrot.slane %v676, 1
      %v683 = vsel %vm587, %v681, %v682
      %v684 = vrot.slane %v677, 1
      %v685 = vsel %vm587, %v682, %v684
      %v689 = vadd.f32 %v668, %v683
      %v690 = vadd.f32 %v669, %v685
      %v691 = vadd.f32 %v670, %v684
      %v692 = vadd.f32 %v644, %v689
      %v693 = vadd.f32 %v645, %v690
      %v694 = vadd.f32 %v646, %v691
      %v695 = vld [vmem:[%s4] sm:$0x1]
      %v697 = vlaneseq
      %v698 = vshrl.u32 %v697, 7
      %v699 = vsub.s32 0, %v698
      %v700 = vrot.slane %v695, %v699
      %v702 = vadd.f32 %v692, %v700
      %v703 = vadd.f32 %v693, %v700
      %v704 = vadd.f32 %v694, %v700
      %v705 = vmax.f32 %v702, 0.0
      %v706 = vmax.f32 %v703, 0.0
      %v707 = vmax.f32 %v704, 0.0
      %v708 = vld [vmem:[%s5] sm:$0xff]
      %v709 = vld [vmem:[%s5 + $0x8] sm:$0xff]
      %v710 = vld [vmem:[%s5 + $0x10] sm:$0xff]
      %v711 = vld [vmem:[%s5 + $0x18] sm:$0xff]
      %v712 = vld [vmem:[%s5 + $0x20] sm:$0xff]
      %v713 = vld [vmem:[%s5 + $0x28] sm:$0xff]
      %v714 = vld [vmem:[%s5 + $0x30] sm:$0xff]
      %v715 = vld [vmem:[%s5 + $0x38] sm:$0xff]
      %v716 = vld [vmem:[%s5 + $0x40] sm:$0xff]
      %v717 = vld [vmem:[%s5 + $0x48] sm:$0xff]
      %v718 = vld [vmem:[%s5 + $0x50] sm:$0xff]
      %v719 = vld [vmem:[%s5 + $0x58] sm:$0xff]
      %v720 = vld [vmem:[%s5 + $0x60] sm:$0xff]
      %v721 = vld [vmem:[%s5 + $0x68] sm:$0xff]
      %v722 = vld [vmem:[%s5 + $0x70] sm:$0xff]
      %v723 = vld [vmem:[%s5 + $0x78] sm:$0xff]
      %v724 = vld [vmem:[%s5 + $0x80] sm:$0xff]
      %v725 = vld [vmem:[%s5 + $0x88] sm:$0xff]
      %v726 = vld [vmem:[%s5 + $0x90] sm:$0xff]
      %v727 = vld [vmem:[%s5 + $0x98] sm:$0xff]
      %v728 = vld [vmem:[%s5 + $0xa0] sm:$0xff]
      %v729 = vld [vmem:[%s5 + $0xa8] sm:$0xff]
      %v730 = vld [vmem:[%s5 + $0xb0] sm:$0xff]
      %v731 = vld [vmem:[%s5 + $0xb8] sm:$0xff]
      %v732 = vld [vmem:[%s5 + $0xc0] sm:$0xff]
      %v733 = vld [vmem:[%s5 + $0xc8] sm:$0xff]
      %v734 = vld [vmem:[%s5 + $0xd0] sm:$0xff]
      %v735 = vld [vmem:[%s5 + $0xd8] sm:$0xff]
      %v736 = vld [vmem:[%s5 + $0xe0] sm:$0xff]
      %v737 = vld [vmem:[%s5 + $0xe8] sm:$0xff]
      %v738 = vld [vmem:[%s5 + $0xf0] sm:$0xff]
      %v739 = vld [vmem:[%s5 + $0xf8] sm:$0xff]
      %v740 = vld [vmem:[%s5 + $0x100] sm:$0xff]
      %v741 = vld [vmem:[%s5 + $0x108] sm:$0xff]
      %v742 = vld [vmem:[%s5 + $0x110] sm:$0xff]
      %v743 = vld [vmem:[%s5 + $0x118] sm:$0xff]
      %v744 = vld [vmem:[%s5 + $0x120] sm:$0xff]
      %v745 = vld [vmem:[%s5 + $0x128] sm:$0xff]
      %v746 = vld [vmem:[%s5 + $0x130] sm:$0xff]
      %v747 = vld [vmem:[%s5 + $0x138] sm:$0xff]
      %v748 = vld [vmem:[%s5 + $0x140] sm:$0xff]
      %v749 = vld [vmem:[%s5 + $0x148] sm:$0xff]
      %v750 = vld [vmem:[%s5 + $0x150] sm:$0xff]
      %v751 = vld [vmem:[%s5 + $0x158] sm:$0xff]
      %v752 = vld [vmem:[%s5 + $0x160] sm:$0xff]
      %v753 = vld [vmem:[%s5 + $0x168] sm:$0xff]
      %v754 = vld [vmem:[%s5 + $0x170] sm:$0xff]
      %v755 = vld [vmem:[%s5 + $0x178] sm:$0xff]
      %v756 = vld [vmem:[%s5 + $0x180] sm:$0xff]
      %v757 = vld [vmem:[%s5 + $0x188] sm:$0xff]
      %v758 = vld [vmem:[%s5 + $0x190] sm:$0xff]
      %v759 = vld [vmem:[%s5 + $0x198] sm:$0xff]
      %v760 = vld [vmem:[%s5 + $0x1a0] sm:$0xff]
      %v761 = vld [vmem:[%s5 + $0x1a8] sm:$0xff]
      %v762 = vld [vmem:[%s5 + $0x1b0] sm:$0xff]
      %v763 = vld [vmem:[%s5 + $0x1b8] sm:$0xff]
      %v764 = vld [vmem:[%s5 + $0x1c0] sm:$0xff]
      %v765 = vld [vmem:[%s5 + $0x1c8] sm:$0xff]
      %v766 = vld [vmem:[%s5 + $0x1d0] sm:$0xff]
      %v767 = vld [vmem:[%s5 + $0x1d8] sm:$0xff]
      %v768 = vld [vmem:[%s5 + $0x1e0] sm:$0xff]
      %v769 = vld [vmem:[%s5 + $0x1e8] sm:$0xff]
      %v770 = vld [vmem:[%s5 + $0x1f0] sm:$0xff]
      %v771 = vld [vmem:[%s5 + $0x1f8] sm:$0xff]
      %v772 = vld [vmem:[%s6] sm:$0x3]
      %v774 = vlaneseq
      %v775 = vshrl.u32 %v774, 7
      %v776 = vsub.s32 0, %v775
      %v777 = vrot.slane %v772, %v776
      %v778 = vlaneseq
      %v779 = vshrl.u32 %v778, 7
      %v780 = vsub.s32 1, %v779
      %v781 = vrot.slane %v772, %v780
      %v790 = vrot.slane %v526, 1
      %v791 = vrot.slane %v527, 1
      %v792 = vsel %vm587, %v790, %v791
      %v793 = vrot.slane %v705, 1
      %v794 = vrot.slane %v706, 1
      %v795 = vsel %vm587, %v793, %v794
      %v796 = vrot.slane %v528, 1
      %v797 = vsel %vm587, %v791, %v796
      %v798 = vrot.slane %v707, 1
      %v799 = vsel %vm587, %v794, %v798
      %804 = vmatprep.subr.mxu0 %v709
      %805 = vmatpush1.msra.mxu0 %v708
      %806 = vmatprep.subr.mxu0 %v711
      %807 = vmatpush1.msra.mxu0 %v710
      %808 = vmatprep.subr.mxu0 %v713
      %809 = vmatpush1.msra.mxu0 %v712
      %810 = vmatprep.subr.mxu0 %v715
      %811 = vmatpush1.msra.mxu0 %v714
      %812 = vmatprep.subr.mxu0 %v717
      %813 = vmatpush1.msra.mxu0 %v716
      %814 = vmatprep.subr.mxu0 %v719
      %815 = vmatpush1.msra.mxu0 %v718
      %816 = vmatprep.subr.mxu0 %v721
      %817 = vmatpush1.msra.mxu0 %v720
      %818 = vmatprep.subr.mxu0 %v723
      %819 = vmatpush1.msra.mxu0 %v722
      %820 = vmatprep.subr.mxu0 %v725
      %821 = vmatpush1.msra.mxu0 %v724
      %822 = vmatprep.subr.mxu0 %v727
      %823 = vmatpush1.msra.mxu0 %v726
      %824 = vmatprep.subr.mxu0 %v729
      %825 = vmatpush1.msra.mxu0 %v728
      %826 = vmatprep.subr.mxu0 %v731
      %827 = vmatpush1.msra.mxu0 %v730
      %828 = vmatprep.subr.mxu0 %v733
      %829 = vmatpush1.msra.mxu0 %v732
      %830 = vmatprep.subr.mxu0 %v735
      %831 = vmatpush1.msra.mxu0 %v734
      %832 = vmatprep.subr.mxu0 %v737
      %833 = vmatpush1.msra.mxu0 %v736
      %834 = vmatprep.subr.mxu0 %v739
      %835 = vmatpush1.msra.mxu0 %v738
      %836 = vmatprep.subr.mxu0 %v741
      %837 = vmatpush1.msra.mxu0 %v740
      %838 = vmatprep.subr.mxu0 %v743
      %839 = vmatpush1.msra.mxu0 %v742
      %840 = vmatprep.subr.mxu0 %v745
      %841 = vmatpush1.msra.mxu0 %v744
      %842 = vmatprep.subr.mxu0 %v747
      %843 = vmatpush1.msra.mxu0 %v746
      %844 = vmatprep.subr.mxu0 %v749
      %845 = vmatpush1.msra.mxu0 %v748
      %846 = vmatprep.subr.mxu0 %v751
      %847 = vmatpush1.msra.mxu0 %v750
      %848 = vmatprep.subr.mxu0 %v753
      %849 = vmatpush1.msra.mxu0 %v752
      %850 = vmatprep.subr.mxu0 %v755
      %851 = vmatpush1.msra.mxu0 %v754
      %852 = vmatprep.subr.mxu0 %v757
      %853 = vmatpush1.msra.mxu0 %v756
      %854 = vmatprep.subr.mxu0 %v759
      %855 = vmatpush1.msra.mxu0 %v758
      %856 = vmatprep.subr.mxu0 %v761
      %857 = vmatpush1.msra.mxu0 %v760
      %858 = vmatprep.subr.mxu0 %v763
      %859 = vmatpush1.msra.mxu0 %v762
      %860 = vmatprep.subr.mxu0 %v765
      %861 = vmatpush1.msra.mxu0 %v764
      %862 = vmatprep.subr.mxu0 %v767
      %863 = vmatpush1.msra.mxu0 %v766
      %864 = vmatprep.subr.mxu0 %v769
      %865 = vmatpush1.msra.mxu0 %v768
      %866 = vmatprep.subr.mxu0 %v771
      %867 = vmatpush1.msra.mxu0 %v770
      %868 = vmatprep.mubr.f32.mxu0 %v795
      %869 = vmatmul.mubr.f32.gmra.mrb[0].mxu0 %v792
      %v870 = vpop.f32.mrb[0].mxu0
      %v871 = vadd.f32 %v777, %v870
      %v872 = vpop.f32.mrb[0].mxu0
      %v873 = vadd.f32 %v781, %v872
      %874 = vmatprep.mubr.f32.mxu0 %v799
      %875 = vmatmul.mubr.f32.gmra.mrb[0].mxu0 %v797
      %v876 = vpop.f32.mrb[0].mxu0
      %v877 = vadd.f32 %v777, %v876
      %v878 = vpop.f32.mrb[0].mxu0
      %v879 = vadd.f32 %v781, %v878
      %880 = vdwg.mxu0
      %v881 = vmax.f32 %v871, 0.0
      %v882 = vmax.f32 %v873, 0.0
      %v883 = vmax.f32 %v877, 0.0
      %v884 = vmax.f32 %v879, 0.0
      %885 = vst [vmem:[%s302] sm:$0xff] %v881
      %886 = vst [vmem:[%s302 + $0x8] sm:$0xff] %v882
      %887 = vst [vmem:[%s302 + $0x10] sm:$0xff] %v883
      %888 = vst [vmem:[%s302 + $0x18] sm:$0xff] %v884
      %s889 = smul.u32 2, %s23
      %p890 = scmp.lt.s32.totalorder %s22, 1
      %s891 = scalar_select %p890, %s22, 1
      %p892 = scmp.lt.s32.totalorder %s889, 1
      %s893 = scalar_select %p892, %s889, 1
      %s894 = smul.addr %s893, 2
      %s895 = smul.addr %s891, 4
      %s896 = sadd.s32 %s894, %s895
      %s897 = smul.addr %s896, 8
      %s898 = scalar_lea.vmem %s7, %s897
      // Predicated region
      $region49: #{fire_forward.1} parent=47 // pred_check
        %p899 = pneg %p202
      $region50: #{fire_forward.1} parent=47 // pred_check_branch
        %901 = sbr.rel (%p899) target = $region52
      $region51: #{fire_forward.1} parent=47 // pred_region
        %s902 = smul.u32 2, %s23
      $region52: #{fire_forward.1} parent=47 // pred_fallthru
        _
    $region48: #{fire_forward.1} parent=5 // pred_fallthru
      _
    %p903 = scmp.le.s32.totalorder 2, %s13
    // Predicated region
    $region53: #{fire_forward.1} parent=5 // pred_check
      %p904 = pneg %p903
    $region54: #{fire_forward.1} parent=5 // pred_check_branch
      %906 = sbr.rel (%p904) target = $region56
    $region55: #{fire_forward.1} parent=5 // pred_region
      %s907 = ssub.s32 %s13, 2
      // Predicated region
      $region57: #{fire_forward.1} parent=55 // pred_check
        %p908 = pneg %p208
      $region58: #{fire_forward.1} parent=55 // pred_check_branch
        %910 = sbr.rel (%p908) target = $region60
      $region59: #{fire_forward.1} parent=55 // pred_region
        %s911 = smul.u32 2, %s25
        %p912 = scmp.lt.s32.totalorder %s24, 1
        %s913 = scalar_select %p912, %s24, 1
        %p914 = scmp.lt.s32.totalorder %s911, 1
        %s915 = scalar_select %p914, %s911, 1
        %s916 = smul.addr %s915, 2
        %s917 = smul.addr %s913, 4
        %s918 = sadd.s32 %s916, %s917
        %s919 = smul.addr %s918, 8
        %s920 = scalar_lea.vmem %s7, %s919
      $region60: #{fire_forward.1} parent=55 // pred_fallthru
        _
    $region56: #{fire_forward.1} parent=5 // pred_fallthru
      _
  $region6: #{fire_forward.1} parent=0 // loop_footer
    %s17 = sadd.s32 1, %s13
  $region7: #{fire_forward.1} parent=0 // loop_footer_branch
    %12 = sbr.rel target = $region3
  $region8: #{fire_forward.1} parent=0 // loop_exit
    _

</llo_original>
